<compile_context>
chip_gen: v5e
topology: v5e:2x2
jax: 0.10.0
libtpu: 0.0.40
codegen_flags: <defaults>
</compile_context>

<pallas_src>
import jax
import jax.numpy as jnp
from jax.experimental import pallas as pl
from jax.experimental.pallas import tpu as pltpu

# ----------------------------- model hyper-params ---------------------------
NODE_LEN = 16            # node_len == node_input_dim (feature dim)
NODE_NUM = 16            # nodes per graph
BATCH_SIZE = 2           # graphs per batch
RETAIN_NODE = 10         # top-k nodes kept by the pooling layer
TENDENCY = 0.7           # unused in this approximation (see TODO above)
HIDDEN = 2 * RETAIN_NODE * NODE_LEN + 1   # = 321 (folded away at init)
EPS_BN = 1e-5


# ------------------------------- fused kernel --------------------------------
def _batchnorm(x, gamma, beta):
    """BatchNorm1d(node_len), training mode (the reference builds a fresh BN
    each forward, so gamma=1 / beta=0 and no running stats are ever used)."""
    mean = jnp.mean(x, axis=0, keepdims=True)
    var = jnp.mean((x - mean) ** 2, axis=0, keepdims=True)
    return (x - mean) * jax.lax.rsqrt(var + EPS_BN) * gamma + beta


def temporal_bcgcn_kernel(ei_ref, ea_ref, x_ref,
                          w1_ref, b1_ref, g1_ref, be1_ref,
                          w2_ref, b2_ref, g2_ref, be2_ref,
                          p_ref, wkf_ref, bfold_ref,
                          out_ref, perm_ref):
    B, N, F, K = BATCH_SIZE, NODE_NUM, NODE_LEN, RETAIN_NODE
    BN = B * N
    E = ei_ref.shape[1]        # padded to a multiple of 128 by the wrapper

    # ---- dense block-diagonal adjacency built with one-hot matmuls (no scatter)
    src = ei_ref[0:1, :]                                           # (1, E)
    dst = ei_ref[1:2, :]                                           # (1, E)
    node_iota = jax.lax.broadcasted_iota(jnp.int32, (BN, E), 0)    # node id rows
    oh_src = (node_iota == src).astype(jnp.float32)                # (BN, E)
    oh_dst = (node_iota == dst).astype(jnp.float32)                # (BN, E)
    wdst = oh_dst * ea_ref[...]                                    # edge weights (pads have attr 0)
    # adj[d, s] = sum_e attr[e] * [dst_e == d] * [src_e == s]
    adj = jax.lax.dot_general(wdst, oh_src, (((1,), (1,)), ((), ())),
                              preferred_element_type=jnp.float32)  # (BN, BN)
    row_i = jax.lax.broadcasted_iota(jnp.int32, (BN, BN), 0)
    col_i = jax.lax.broadcasted_iota(jnp.int32, (BN, BN), 1)
    adj = adj + (row_i == col_i).astype(jnp.float32)               # self loops
    deg = jnp.sum(adj, axis=1, keepdims=True)                      # (BN, 1), >= 1
    adj = adj * pl.reciprocal(deg, approx=True)                    # mean agg (EUP recip)

    # ---- conv1 -> BN1 -> conv2 -> BN2 (single 32x32 block-diag matmul each)
    x0 = x_ref[...]                                                # (BN, F)
    h1 = jnp.dot(adj, x0, preferred_element_type=jnp.float32)
    h1 = jnp.dot(h1, w1_ref[...], preferred_element_type=jnp.float32) + b1_ref[...]
    h1 = _batchnorm(h1, g1_ref[...], be1_ref[...])

    h2 = jnp.dot(adj, h1, preferred_element_type=jnp.float32)
    h2 = jnp.dot(h2, w2_ref[...], preferred_element_type=jnp.float32) + b2_ref[...]
    x2 = _batchnorm(h2, g2_ref[...], be2_ref[...])

    # ---- Category_TopK_Pooling: projection score (nodes on LANES), batched top-k
    p_row = p_ref[...]                                             # (1, F)
    inv_norm = jax.lax.rsqrt(jnp.sum(p_row * p_row) + 1e-12)

    x2_blk = [x2[b * N:(b + 1) * N, :] for b in range(B)]          # static (N, F) slices
    s_rows = [jax.lax.dot_general(p_row, xb, (((1,), (1,)), ((), ())),
                                  preferred_element_type=jnp.float32) * inv_norm
              for xb in x2_blk]                                    # each (1, N)
    sb = jnp.concatenate(s_rows, axis=0)                           # (B, N) — nodes on lanes

    iota_n = jax.lax.broadcasted_iota(jnp.int32, (B, N), 1)        # lane index per row
    rowk = jax.lax.broadcasted_iota(jnp.int32, (K, N), 0)          # selection-matrix row id
    colk = jax.lax.broadcasted_iota(jnp.int32, (B, K), 1)          # perm column id
    n_off = jax.lax.broadcasted_iota(jnp.int32, (B, 1), 0) * N     # graph node offset
    neg_inf = jnp.float32(-jnp.inf)

    selg = [jnp.zeros((K, N), jnp.float32) for _ in range(B)]      # gated one-hot rows
    perm_acc = jnp.zeros((B, K), jnp.int32)

    for k in range(K):                      # K serial steps, vectorized over batch
        m = jnp.max(sb, axis=1, keepdims=True)                     # (B, 1) k-th largest
        sel = jnp.min(jnp.where(sb == m, iota_n, N),
                      axis=1, keepdims=True)                       # (B, 1) lowest-index tie-break
        gate = jnp.tanh(m)                                         # (B, 1)
        goh = (iota_n == sel).astype(jnp.float32) * gate           # (B, N) gated one-hot
        perm_acc = jnp.where(colk == k, sel + n_off, perm_acc)     # place global index at col k
        for b in range(B):
            selg[b] = jnp.where(rowk == k, goh[b:b + 1, :], selg[b])
        sb = jnp.where(iota_n == sel, neg_inf, sb)                 # mask for next k

    # ---- gather+gate via one MXU matmul per graph, folded Linear pair, sigmoid
    wkf = wkf_ref[...]                                             # (K, F) folded lin@cls weights
    row_b = jax.lax.broadcasted_iota(jnp.int32, (B, 1), 0)
    logits = jnp.zeros((B, 1), jnp.float32)
    for b in range(B):
        g_rows = jnp.dot(selg[b], x2_blk[b],
                         preferred_element_type=jnp.float32)       # (K, F) gated selected rows
        logit_b = jnp.sum(g_rows * wkf)                            # folded linear contraction
        logits = logits + jnp.where(row_b == b, logit_b, 0.0)

    out_ref[...] = jax.nn.sigmoid(logits + bfold_ref[...])         # (B, 1)
    perm_ref[...] = perm_acc                                       # (B, K) single wide store


# ---------------------------------- wrapper -----------------------------------
@jax.jit
def temporal_bcgcn_forward(params, x, edge_index, edge_attr, batch):
    # `batch` is unused: edge_index already carries global (batched) node ids,
    # so the adjacency is built block-diagonal directly inside the kernel.
    del batch
    B, K = BATCH_SIZE, RETAIN_NODE
    E = edge_index.shape[1]
    E_pad = max(128, ((E + 127) // 128) * 128)        # lane-dense one-hot build
    ei = jnp.pad(edge_index.astype(jnp.int32), ((0, 0), (0, E_pad - E)))
    ea = jnp.pad(edge_attr.reshape(1, E).astype(jnp.float32),
                 ((0, 0), (0, E_pad - E)))            # dummy edges carry attr 0

    vmem = pl.BlockSpec(memory_space=pltpu.MemorySpace.VMEM)
    out2d, perm2d = pl.pallas_call(
        temporal_bcgcn_kernel,
        out_shape=(jax.ShapeDtypeStruct((B, 1), jnp.float32),
                   jax.ShapeDtypeStruct((B, K), jnp.int32)),
        in_specs=[vmem] * 14,
        out_specs=(vmem, vmem),
    )(ei, ea, x,
      params["w1"], params["b1"], params["g1"], params["be1"],
      params["w2"], params["b2"], params["g2"], params["be2"],
      params["p"], params["wkf"], params["bfold"])
    return out2d.reshape(-1), perm2d.reshape(-1)


# ------------------------------- parameters ----------------------------------
def init_params():
    """Parameters in kernel-ready layouts; the activation-free Linear pair
    (lin -> classifier) is folded at init: W = lin_w @ cls_w, b = lin_b @ cls_w + cls_b."""
    key = jax.random.PRNGKey(12)   # deterministic (mirrors torch.manual_seed(12))
    ks = jax.random.split(key, 8)
    F, K, H = NODE_LEN, RETAIN_NODE, HIDDEN
    scale = lambda fan_in: 1.0 / jnp.sqrt(jnp.float32(fan_in))

    lin_w = jax.random.normal(ks[3], (K * F, H), jnp.float32) * scale(K * F)
    lin_b = jnp.zeros((1, H), jnp.float32)
    cls_w = jax.random.normal(ks[4], (H, 1), jnp.float32) * scale(H)
    cls_b = jnp.zeros((1, 1), jnp.float32)
    wkf = (lin_w @ cls_w).reshape(K, F)               # folded weight, (K, F)
    bfold = lin_b @ cls_w + cls_b                     # folded bias, (1, 1)

    return {
        "w1": jax.random.normal(ks[0], (F, F), jnp.float32) * scale(F),
        "b1": jnp.zeros((1, F), jnp.float32),
        "g1": jnp.ones((1, F), jnp.float32),     # BN affine (fresh BN => 1)
        "be1": jnp.zeros((1, F), jnp.float32),   # BN affine (fresh BN => 0)
        "w2": jax.random.normal(ks[1], (F, F), jnp.float32) * scale(F),
        "b2": jnp.zeros((1, F), jnp.float32),
        "g2": jnp.ones((1, F), jnp.float32),
        "be2": jnp.zeros((1, F), jnp.float32),
        "p": jax.random.normal(ks[2], (1, F), jnp.float32),   # projection, row layout
        "wkf": wkf,
        "bfold": bfold,
    }


# ----------------------------------- main -------------------------------------
if __name__ == "__main__":
    B, N, F, K = BATCH_SIZE, NODE_NUM, NODE_LEN, RETAIN_NODE
    key = jax.random.PRNGKey(0)
    kx, ke = jax.random.split(key, 2)

    x = jax.random.normal(kx, (B * N, F), jnp.float32)

    # deterministic edge structure: ring + chord within each graph (global ids)
    edges = []
    for b in range(B):
        off = b * N
        for i in range(N):
            edges.append((off + i, off + (i + 1) % N))
            edges.append((off + (i + 1) % N, off + i))
            edges.append((off + i, off + (i + 3) % N))
    edge_index = jnp.asarray(edges, dtype=jnp.int32).T          # (2, E)
    edge_attr = jax.random.uniform(ke, (edge_index.shape[1],), jnp.float32, 0.1, 1.0)
    batch = jnp.repeat(jnp.arange(B, dtype=jnp.int32), N)       # node -> graph id

    params = init_params()
    out, perm = temporal_bcgcn_forward(params, x, edge_index, edge_attr, batch)
    jax.block_until_ready((out, perm))

    assert out.shape == (B,) and perm.shape == (B * K,)
    assert bool(jnp.all((out >= 0.0) & (out <= 1.0)))
    assert bool(jnp.all((perm >= 0) & (perm < B * N)))
    # each graph's retained nodes must be distinct and belong to that graph
    for b in range(B):
        pb = perm[b * K:(b + 1) * K]
        assert bool(jnp.all((pb >= b * N) & (pb < (b + 1) * N)))
        assert len(set(map(int, pb))) == K
    print("KERNEL_OK")
</pallas_src>

<mosaic_0001>
module attributes {stable_mosaic.version = 11 : i64} {
  func.func @temporal_bcgcn_kernel(%arg0: memref<2x128xi32, #tpu.memory_space<vmem>>, %arg1: memref<1x128xf32, #tpu.memory_space<vmem>>, %arg2: memref<32x16xf32, #tpu.memory_space<vmem>>, %arg3: memref<16x16xf32, #tpu.memory_space<vmem>>, %arg4: memref<1x16xf32, #tpu.memory_space<vmem>>, %arg5: memref<1x16xf32, #tpu.memory_space<vmem>>, %arg6: memref<1x16xf32, #tpu.memory_space<vmem>>, %arg7: memref<16x16xf32, #tpu.memory_space<vmem>>, %arg8: memref<1x16xf32, #tpu.memory_space<vmem>>, %arg9: memref<1x16xf32, #tpu.memory_space<vmem>>, %arg10: memref<1x16xf32, #tpu.memory_space<vmem>>, %arg11: memref<1x16xf32, #tpu.memory_space<vmem>>, %arg12: memref<10x16xf32, #tpu.memory_space<vmem>>, %arg13: memref<1x1xf32, #tpu.memory_space<vmem>>, %arg14: memref<2x1xf32, #tpu.memory_space<vmem>>, %arg15: memref<2x10xi32, #tpu.memory_space<vmem>>) attributes {dimension_semantics = [], scalar_prefetch = 0 : i64, scratch_operands = 0 : i64, tpu.core_type = #tpu.core_type<tc>} {
    %c0 = arith.constant 0 : index
    %c0_0 = arith.constant 0 : index
    %0 = vector.load %arg0[%c0, %c0_0] : memref<2x128xi32, #tpu.memory_space<vmem>>, vector<1x128xi32>
    %c1 = arith.constant 1 : index
    %c0_1 = arith.constant 0 : index
    %1 = vector.load %arg0[%c1, %c0_1] : memref<2x128xi32, #tpu.memory_space<vmem>>, vector<1x128xi32>
    %2 = tpu.iota {dimensions = array<i32: 0>} : vector<32x128xi32>
    %3 = vector.broadcast %0 : vector<1x128xi32> to vector<32x128xi32>
    %4 = arith.cmpi eq, %2, %3 : vector<32x128xi32>
    %5 = arith.extui %4 : vector<32x128xi1> to vector<32x128xi32>
    %6 = arith.sitofp %5 : vector<32x128xi32> to vector<32x128xf32>
    %7 = vector.broadcast %1 : vector<1x128xi32> to vector<32x128xi32>
    %8 = arith.cmpi eq, %2, %7 : vector<32x128xi32>
    %9 = arith.extui %8 : vector<32x128xi1> to vector<32x128xi32>
    %10 = arith.sitofp %9 : vector<32x128xi32> to vector<32x128xf32>
    %c0_2 = arith.constant 0 : index
    %c0_3 = arith.constant 0 : index
    %11 = vector.load %arg1[%c0_2, %c0_3] : memref<1x128xf32, #tpu.memory_space<vmem>>, vector<1x128xf32>
    %12 = vector.broadcast %11 : vector<1x128xf32> to vector<32x128xf32>
    %13 = arith.mulf %10, %12 : vector<32x128xf32>
    %cst = arith.constant dense<0.000000e+00> : vector<32x32xf32>
    %14 = tpu.matmul %13, %6, %cst {dimension_numbers = #tpu.dot_dimension_numbers<[1], [1], [0], [0], [0, 0, 1, 0], [], []>} : vector<32x128xf32>, vector<32x128xf32>, vector<32x32xf32> -> vector<32x32xf32>
    %15 = tpu.iota {dimensions = array<i32: 0>} : vector<32x32xi32>
    %16 = tpu.iota {dimensions = array<i32: 1>} : vector<32x32xi32>
    %17 = arith.cmpi eq, %15, %16 : vector<32x32xi32>
    %18 = arith.extui %17 : vector<32x32xi1> to vector<32x32xi32>
    %19 = arith.sitofp %18 : vector<32x32xi32> to vector<32x32xf32>
    %20 = arith.addf %14, %19 : vector<32x32xf32>
    %cst_4 = arith.constant dense<0.000000e+00> : vector<32xf32>
    %21 = vector.multi_reduction <add>, %20, %cst_4 [1] : vector<32x32xf32> to vector<32xf32>
    %22 = vector.shape_cast %21 : vector<32xf32> to vector<32x1xf32>
    %23 = tpu.reciprocal %22 {approx = true} : vector<32x1xf32> -> vector<32x1xf32>
    %24 = vector.broadcast %23 : vector<32x1xf32> to vector<32x32xf32>
    %25 = arith.mulf %20, %24 : vector<32x32xf32>
    %c0_5 = arith.constant 0 : index
    %c0_6 = arith.constant 0 : index
    %26 = vector.load %arg2[%c0_5, %c0_6] : memref<32x16xf32, #tpu.memory_space<vmem>>, vector<32x16xf32>
    %cst_7 = arith.constant dense<0.000000e+00> : vector<32x16xf32>
    %27 = tpu.matmul %25, %26, %cst_7 {dimension_numbers = #tpu.dot_dimension_numbers<[1], [0], [0], [1], [0, 0, 1, 1], [], []>} : vector<32x32xf32>, vector<32x16xf32>, vector<32x16xf32> -> vector<32x16xf32>
    %c0_8 = arith.constant 0 : index
    %c0_9 = arith.constant 0 : index
    %28 = vector.load %arg3[%c0_8, %c0_9] : memref<16x16xf32, #tpu.memory_space<vmem>>, vector<16x16xf32>
    %cst_10 = arith.constant dense<0.000000e+00> : vector<32x16xf32>
    %29 = tpu.matmul %27, %28, %cst_10 {dimension_numbers = #tpu.dot_dimension_numbers<[1], [0], [0], [1], [0, 0, 1, 1], [], []>} : vector<32x16xf32>, vector<16x16xf32>, vector<32x16xf32> -> vector<32x16xf32>
    %c0_11 = arith.constant 0 : index
    %c0_12 = arith.constant 0 : index
    %30 = vector.load %arg4[%c0_11, %c0_12] : memref<1x16xf32, #tpu.memory_space<vmem>>, vector<1x16xf32>
    %31 = vector.broadcast %30 : vector<1x16xf32> to vector<32x16xf32>
    %32 = arith.addf %29, %31 : vector<32x16xf32>
    %c0_13 = arith.constant 0 : index
    %c0_14 = arith.constant 0 : index
    %33 = vector.load %arg5[%c0_13, %c0_14] : memref<1x16xf32, #tpu.memory_space<vmem>>, vector<1x16xf32>
    %c0_15 = arith.constant 0 : index
    %c0_16 = arith.constant 0 : index
    %34 = vector.load %arg6[%c0_15, %c0_16] : memref<1x16xf32, #tpu.memory_space<vmem>>, vector<1x16xf32>
    %cst_17 = arith.constant dense<0.000000e+00> : vector<16xf32>
    %35 = vector.multi_reduction <add>, %32, %cst_17 [0] : vector<32x16xf32> to vector<16xf32>
    %36 = vector.shape_cast %35 : vector<16xf32> to vector<1x16xf32>
    %cst_18 = arith.constant 3.200000e+01 : f32
    %37 = vector.broadcast %cst_18 : f32 to vector<1x16xf32>
    %38 = arith.divf %36, %37 : vector<1x16xf32>
    %39 = vector.broadcast %38 : vector<1x16xf32> to vector<32x16xf32>
    %40 = arith.subf %32, %39 : vector<32x16xf32>
    %41 = arith.mulf %40, %40 : vector<32x16xf32>
    %cst_19 = arith.constant dense<0.000000e+00> : vector<16xf32>
    %42 = vector.multi_reduction <add>, %41, %cst_19 [0] : vector<32x16xf32> to vector<16xf32>
    %43 = vector.shape_cast %42 : vector<16xf32> to vector<1x16xf32>
    %cst_20 = arith.constant 3.200000e+01 : f32
    %44 = vector.broadcast %cst_20 : f32 to vector<1x16xf32>
    %45 = arith.divf %43, %44 : vector<1x16xf32>
    %46 = vector.broadcast %38 : vector<1x16xf32> to vector<32x16xf32>
    %47 = arith.subf %32, %46 : vector<32x16xf32>
    %cst_21 = arith.constant 9.99999974E-6 : f32
    %48 = vector.broadcast %cst_21 : f32 to vector<1x16xf32>
    %49 = arith.addf %45, %48 : vector<1x16xf32>
    %50 = math.rsqrt %49 : vector<1x16xf32>
    %51 = vector.broadcast %50 : vector<1x16xf32> to vector<32x16xf32>
    %52 = arith.mulf %47, %51 : vector<32x16xf32>
    %53 = vector.broadcast %33 : vector<1x16xf32> to vector<32x16xf32>
    %54 = arith.mulf %52, %53 : vector<32x16xf32>
    %55 = vector.broadcast %34 : vector<1x16xf32> to vector<32x16xf32>
    %56 = arith.addf %54, %55 : vector<32x16xf32>
    %cst_22 = arith.constant dense<0.000000e+00> : vector<32x16xf32>
    %57 = tpu.matmul %25, %56, %cst_22 {dimension_numbers = #tpu.dot_dimension_numbers<[1], [0], [0], [1], [0, 0, 1, 1], [], []>} : vector<32x32xf32>, vector<32x16xf32>, vector<32x16xf32> -> vector<32x16xf32>
    %c0_23 = arith.constant 0 : index
    %c0_24 = arith.constant 0 : index
    %58 = vector.load %arg7[%c0_23, %c0_24] : memref<16x16xf32, #tpu.memory_space<vmem>>, vector<16x16xf32>
    %cst_25 = arith.constant dense<0.000000e+00> : vector<32x16xf32>
    %59 = tpu.matmul %57, %58, %cst_25 {dimension_numbers = #tpu.dot_dimension_numbers<[1], [0], [0], [1], [0, 0, 1, 1], [], []>} : vector<32x16xf32>, vector<16x16xf32>, vector<32x16xf32> -> vector<32x16xf32>
    %c0_26 = arith.constant 0 : index
    %c0_27 = arith.constant 0 : index
    %60 = vector.load %arg8[%c0_26, %c0_27] : memref<1x16xf32, #tpu.memory_space<vmem>>, vector<1x16xf32>
    %61 = vector.broadcast %60 : vector<1x16xf32> to vector<32x16xf32>
    %62 = arith.addf %59, %61 : vector<32x16xf32>
    %c0_28 = arith.constant 0 : index
    %c0_29 = arith.constant 0 : index
    %63 = vector.load %arg9[%c0_28, %c0_29] : memref<1x16xf32, #tpu.memory_space<vmem>>, vector<1x16xf32>
    %c0_30 = arith.constant 0 : index
    %c0_31 = arith.constant 0 : index
    %64 = vector.load %arg10[%c0_30, %c0_31] : memref<1x16xf32, #tpu.memory_space<vmem>>, vector<1x16xf32>
    %cst_32 = arith.constant dense<0.000000e+00> : vector<16xf32>
    %65 = vector.multi_reduction <add>, %62, %cst_32 [0] : vector<32x16xf32> to vector<16xf32>
    %66 = vector.shape_cast %65 : vector<16xf32> to vector<1x16xf32>
    %cst_33 = arith.constant 3.200000e+01 : f32
    %67 = vector.broadcast %cst_33 : f32 to vector<1x16xf32>
    %68 = arith.divf %66, %67 : vector<1x16xf32>
    %69 = vector.broadcast %68 : vector<1x16xf32> to vector<32x16xf32>
    %70 = arith.subf %62, %69 : vector<32x16xf32>
    %71 = arith.mulf %70, %70 : vector<32x16xf32>
    %cst_34 = arith.constant dense<0.000000e+00> : vector<16xf32>
    %72 = vector.multi_reduction <add>, %71, %cst_34 [0] : vector<32x16xf32> to vector<16xf32>
    %73 = vector.shape_cast %72 : vector<16xf32> to vector<1x16xf32>
    %cst_35 = arith.constant 3.200000e+01 : f32
    %74 = vector.broadcast %cst_35 : f32 to vector<1x16xf32>
    %75 = arith.divf %73, %74 : vector<1x16xf32>
    %76 = vector.broadcast %68 : vector<1x16xf32> to vector<32x16xf32>
    %77 = arith.subf %62, %76 : vector<32x16xf32>
    %cst_36 = arith.constant 9.99999974E-6 : f32
    %78 = vector.broadcast %cst_36 : f32 to vector<1x16xf32>
    %79 = arith.addf %75, %78 : vector<1x16xf32>
    %80 = math.rsqrt %79 : vector<1x16xf32>
    %81 = vector.broadcast %80 : vector<1x16xf32> to vector<32x16xf32>
    %82 = arith.mulf %77, %81 : vector<32x16xf32>
    %83 = vector.broadcast %63 : vector<1x16xf32> to vector<32x16xf32>
    %84 = arith.mulf %82, %83 : vector<32x16xf32>
    %85 = vector.broadcast %64 : vector<1x16xf32> to vector<32x16xf32>
    %86 = arith.addf %84, %85 : vector<32x16xf32>
    %c0_37 = arith.constant 0 : index
    %c0_38 = arith.constant 0 : index
    %87 = vector.load %arg11[%c0_37, %c0_38] : memref<1x16xf32, #tpu.memory_space<vmem>>, vector<1x16xf32>
    %88 = arith.mulf %87, %87 : vector<1x16xf32>
    %89 = vector.shape_cast %88 : vector<1x16xf32> to vector<1x1x16xf32>
    %cst_39 = arith.constant dense<0.000000e+00> : vector<1xf32>
    %90 = vector.multi_reduction <add>, %89, %cst_39 [1, 2] : vector<1x1x16xf32> to vector<1xf32>
    %91 = vector.shape_cast %90 : vector<1xf32> to vector<1x1x1xf32>
    %92 = vector.extract %91[0, 0, 0] : f32 from vector<1x1x1xf32>
    %cst_40 = arith.constant 9.99999996E-13 : f32
    %93 = arith.addf %92, %cst_40 : f32
    %94 = math.rsqrt %93 : f32
    %95 = vector.extract_strided_slice %86 {offsets = [0, 0], sizes = [16, 16], strides = [1, 1]} : vector<32x16xf32> to vector<16x16xf32>
    %96 = vector.extract_strided_slice %86 {offsets = [16, 0], sizes = [16, 16], strides = [1, 1]} : vector<32x16xf32> to vector<16x16xf32>
    %cst_41 = arith.constant dense<0.000000e+00> : vector<1x16xf32>
    %97 = tpu.matmul %87, %95, %cst_41 {dimension_numbers = #tpu.dot_dimension_numbers<[1], [1], [0], [0], [0, 0, 1, 0], [], []>} : vector<1x16xf32>, vector<16x16xf32>, vector<1x16xf32> -> vector<1x16xf32>
    %98 = vector.broadcast %94 : f32 to vector<1x16xf32>
    %99 = arith.mulf %97, %98 : vector<1x16xf32>
    %cst_42 = arith.constant dense<0.000000e+00> : vector<1x16xf32>
    %100 = tpu.matmul %87, %96, %cst_42 {dimension_numbers = #tpu.dot_dimension_numbers<[1], [1], [0], [0], [0, 0, 1, 0], [], []>} : vector<1x16xf32>, vector<16x16xf32>, vector<1x16xf32> -> vector<1x16xf32>
    %101 = vector.broadcast %94 : f32 to vector<1x16xf32>
    %102 = arith.mulf %100, %101 : vector<1x16xf32>
    %103 = tpu.concatenate %99, %102 in 0 : vector<1x16xf32>, vector<1x16xf32> -> vector<2x16xf32>
    %104 = tpu.iota {dimensions = array<i32: 1>} : vector<2x16xi32>
    %105 = tpu.iota {dimensions = array<i32: 0>} : vector<10x16xi32>
    %106 = tpu.iota {dimensions = array<i32: 1>} : vector<2x10xi32>
    %107 = tpu.iota {dimensions = array<i32: 0>} : vector<2x1xi32>
    %c16_i32 = arith.constant 16 : i32
    %108 = vector.broadcast %c16_i32 : i32 to vector<2x1xi32>
    %109 = arith.muli %107, %108 : vector<2x1xi32>
    %cst_43 = arith.constant 0.000000e+00 : f32
    %110 = vector.broadcast %cst_43 : f32 to vector<10x16xf32>
    %cst_44 = arith.constant 0.000000e+00 : f32
    %111 = vector.broadcast %cst_44 : f32 to vector<10x16xf32>
    %c0_i32 = arith.constant 0 : i32
    %112 = vector.broadcast %c0_i32 : i32 to vector<2x10xi32>
    %cst_45 = arith.constant dense<0xFF800000> : vector<2xf32>
    %113 = vector.multi_reduction <maximumf>, %103, %cst_45 [1] : vector<2x16xf32> to vector<2xf32>
    %114 = vector.shape_cast %113 : vector<2xf32> to vector<2x1xf32>
    %115 = vector.broadcast %114 : vector<2x1xf32> to vector<2x16xf32>
    %116 = arith.cmpf oeq, %103, %115 : vector<2x16xf32>
    %c16_i32_46 = arith.constant 16 : i32
    %117 = vector.broadcast %c16_i32_46 : i32 to vector<2x16xi32>
    %118 = arith.select %116, %104, %117 : vector<2x16xi1>, vector<2x16xi32>
    %cst_47 = arith.constant dense<2147483647> : vector<2xi32>
    %119 = vector.multi_reduction <minsi>, %118, %cst_47 [1] : vector<2x16xi32> to vector<2xi32>
    %120 = vector.shape_cast %119 : vector<2xi32> to vector<2x1xi32>
    %121 = math.tanh %114 : vector<2x1xf32>
    %122 = vector.broadcast %120 : vector<2x1xi32> to vector<2x16xi32>
    %123 = arith.cmpi eq, %104, %122 : vector<2x16xi32>
    %124 = arith.extui %123 : vector<2x16xi1> to vector<2x16xi32>
    %125 = arith.sitofp %124 : vector<2x16xi32> to vector<2x16xf32>
    %126 = vector.broadcast %121 : vector<2x1xf32> to vector<2x16xf32>
    %127 = arith.mulf %125, %126 : vector<2x16xf32>
    %c0_i32_48 = arith.constant 0 : i32
    %128 = vector.broadcast %c0_i32_48 : i32 to vector<2x10xi32>
    %129 = arith.cmpi eq, %106, %128 : vector<2x10xi32>
    %130 = arith.addi %120, %109 : vector<2x1xi32>
    %131 = vector.shape_cast %130 : vector<2x1xi32> to vector<2x1xi32>
    %132 = vector.broadcast %131 : vector<2x1xi32> to vector<2x10xi32>
    %133 = arith.select %129, %132, %112 : vector<2x10xi1>, vector<2x10xi32>
    %c0_i32_49 = arith.constant 0 : i32
    %134 = vector.broadcast %c0_i32_49 : i32 to vector<10x16xi32>
    %135 = arith.cmpi eq, %105, %134 : vector<10x16xi32>
    %136 = vector.extract_strided_slice %127 {offsets = [0, 0], sizes = [1, 16], strides = [1, 1]} : vector<2x16xf32> to vector<1x16xf32>
    %137 = vector.shape_cast %136 : vector<1x16xf32> to vector<1x16xf32>
    %138 = vector.broadcast %137 : vector<1x16xf32> to vector<10x16xf32>
    %139 = arith.select %135, %138, %110 : vector<10x16xi1>, vector<10x16xf32>
    %c0_i32_50 = arith.constant 0 : i32
    %140 = vector.broadcast %c0_i32_50 : i32 to vector<10x16xi32>
    %141 = arith.cmpi eq, %105, %140 : vector<10x16xi32>
    %142 = vector.extract_strided_slice %127 {offsets = [1, 0], sizes = [1, 16], strides = [1, 1]} : vector<2x16xf32> to vector<1x16xf32>
    %143 = vector.shape_cast %142 : vector<1x16xf32> to vector<1x16xf32>
    %144 = vector.broadcast %143 : vector<1x16xf32> to vector<10x16xf32>
    %145 = arith.select %141, %144, %111 : vector<10x16xi1>, vector<10x16xf32>
    %146 = vector.broadcast %120 : vector<2x1xi32> to vector<2x16xi32>
    %147 = arith.cmpi eq, %104, %146 : vector<2x16xi32>
    %cst_51 = arith.constant 0xFF800000 : f32
    %148 = vector.broadcast %cst_51 : f32 to vector<2x16xf32>
    %149 = arith.select %147, %148, %103 : vector<2x16xi1>, vector<2x16xf32>
    %cst_52 = arith.constant dense<0xFF800000> : vector<2xf32>
    %150 = vector.multi_reduction <maximumf>, %149, %cst_52 [1] : vector<2x16xf32> to vector<2xf32>
    %151 = vector.shape_cast %150 : vector<2xf32> to vector<2x1xf32>
    %152 = vector.broadcast %151 : vector<2x1xf32> to vector<2x16xf32>
    %153 = arith.cmpf oeq, %149, %152 : vector<2x16xf32>
    %c16_i32_53 = arith.constant 16 : i32
    %154 = vector.broadcast %c16_i32_53 : i32 to vector<2x16xi32>
    %155 = arith.select %153, %104, %154 : vector<2x16xi1>, vector<2x16xi32>
    %cst_54 = arith.constant dense<2147483647> : vector<2xi32>
    %156 = vector.multi_reduction <minsi>, %155, %cst_54 [1] : vector<2x16xi32> to vector<2xi32>
    %157 = vector.shape_cast %156 : vector<2xi32> to vector<2x1xi32>
    %158 = math.tanh %151 : vector<2x1xf32>
    %159 = vector.broadcast %157 : vector<2x1xi32> to vector<2x16xi32>
    %160 = arith.cmpi eq, %104, %159 : vector<2x16xi32>
    %161 = arith.extui %160 : vector<2x16xi1> to vector<2x16xi32>
    %162 = arith.sitofp %161 : vector<2x16xi32> to vector<2x16xf32>
    %163 = vector.broadcast %158 : vector<2x1xf32> to vector<2x16xf32>
    %164 = arith.mulf %162, %163 : vector<2x16xf32>
    %c1_i32 = arith.constant 1 : i32
    %165 = vector.broadcast %c1_i32 : i32 to vector<2x10xi32>
    %166 = arith.cmpi eq, %106, %165 : vector<2x10xi32>
    %167 = arith.addi %157, %109 : vector<2x1xi32>
    %168 = vector.shape_cast %167 : vector<2x1xi32> to vector<2x1xi32>
    %169 = vector.broadcast %168 : vector<2x1xi32> to vector<2x10xi32>
    %170 = arith.select %166, %169, %133 : vector<2x10xi1>, vector<2x10xi32>
    %c1_i32_55 = arith.constant 1 : i32
    %171 = vector.broadcast %c1_i32_55 : i32 to vector<10x16xi32>
    %172 = arith.cmpi eq, %105, %171 : vector<10x16xi32>
    %173 = vector.extract_strided_slice %164 {offsets = [0, 0], sizes = [1, 16], strides = [1, 1]} : vector<2x16xf32> to vector<1x16xf32>
    %174 = vector.shape_cast %173 : vector<1x16xf32> to vector<1x16xf32>
    %175 = vector.broadcast %174 : vector<1x16xf32> to vector<10x16xf32>
    %176 = arith.select %172, %175, %139 : vector<10x16xi1>, vector<10x16xf32>
    %c1_i32_56 = arith.constant 1 : i32
    %177 = vector.broadcast %c1_i32_56 : i32 to vector<10x16xi32>
    %178 = arith.cmpi eq, %105, %177 : vector<10x16xi32>
    %179 = vector.extract_strided_slice %164 {offsets = [1, 0], sizes = [1, 16], strides = [1, 1]} : vector<2x16xf32> to vector<1x16xf32>
    %180 = vector.shape_cast %179 : vector<1x16xf32> to vector<1x16xf32>
    %181 = vector.broadcast %180 : vector<1x16xf32> to vector<10x16xf32>
    %182 = arith.select %178, %181, %145 : vector<10x16xi1>, vector<10x16xf32>
    %183 = vector.broadcast %157 : vector<2x1xi32> to vector<2x16xi32>
    %184 = arith.cmpi eq, %104, %183 : vector<2x16xi32>
    %cst_57 = arith.constant 0xFF800000 : f32
    %185 = vector.broadcast %cst_57 : f32 to vector<2x16xf32>
    %186 = arith.select %184, %185, %149 : vector<2x16xi1>, vector<2x16xf32>
    %cst_58 = arith.constant dense<0xFF800000> : vector<2xf32>
    %187 = vector.multi_reduction <maximumf>, %186, %cst_58 [1] : vector<2x16xf32> to vector<2xf32>
    %188 = vector.shape_cast %187 : vector<2xf32> to vector<2x1xf32>
    %189 = vector.broadcast %188 : vector<2x1xf32> to vector<2x16xf32>
    %190 = arith.cmpf oeq, %186, %189 : vector<2x16xf32>
    %c16_i32_59 = arith.constant 16 : i32
    %191 = vector.broadcast %c16_i32_59 : i32 to vector<2x16xi32>
    %192 = arith.select %190, %104, %191 : vector<2x16xi1>, vector<2x16xi32>
    %cst_60 = arith.constant dense<2147483647> : vector<2xi32>
    %193 = vector.multi_reduction <minsi>, %192, %cst_60 [1] : vector<2x16xi32> to vector<2xi32>
    %194 = vector.shape_cast %193 : vector<2xi32> to vector<2x1xi32>
    %195 = math.tanh %188 : vector<2x1xf32>
    %196 = vector.broadcast %194 : vector<2x1xi32> to vector<2x16xi32>
    %197 = arith.cmpi eq, %104, %196 : vector<2x16xi32>
    %198 = arith.extui %197 : vector<2x16xi1> to vector<2x16xi32>
    %199 = arith.sitofp %198 : vector<2x16xi32> to vector<2x16xf32>
    %200 = vector.broadcast %195 : vector<2x1xf32> to vector<2x16xf32>
    %201 = arith.mulf %199, %200 : vector<2x16xf32>
    %c2_i32 = arith.constant 2 : i32
    %202 = vector.broadcast %c2_i32 : i32 to vector<2x10xi32>
    %203 = arith.cmpi eq, %106, %202 : vector<2x10xi32>
    %204 = arith.addi %194, %109 : vector<2x1xi32>
    %205 = vector.shape_cast %204 : vector<2x1xi32> to vector<2x1xi32>
    %206 = vector.broadcast %205 : vector<2x1xi32> to vector<2x10xi32>
    %207 = arith.select %203, %206, %170 : vector<2x10xi1>, vector<2x10xi32>
    %c2_i32_61 = arith.constant 2 : i32
    %208 = vector.broadcast %c2_i32_61 : i32 to vector<10x16xi32>
    %209 = arith.cmpi eq, %105, %208 : vector<10x16xi32>
    %210 = vector.extract_strided_slice %201 {offsets = [0, 0], sizes = [1, 16], strides = [1, 1]} : vector<2x16xf32> to vector<1x16xf32>
    %211 = vector.shape_cast %210 : vector<1x16xf32> to vector<1x16xf32>
    %212 = vector.broadcast %211 : vector<1x16xf32> to vector<10x16xf32>
    %213 = arith.select %209, %212, %176 : vector<10x16xi1>, vector<10x16xf32>
    %c2_i32_62 = arith.constant 2 : i32
    %214 = vector.broadcast %c2_i32_62 : i32 to vector<10x16xi32>
    %215 = arith.cmpi eq, %105, %214 : vector<10x16xi32>
    %216 = vector.extract_strided_slice %201 {offsets = [1, 0], sizes = [1, 16], strides = [1, 1]} : vector<2x16xf32> to vector<1x16xf32>
    %217 = vector.shape_cast %216 : vector<1x16xf32> to vector<1x16xf32>
    %218 = vector.broadcast %217 : vector<1x16xf32> to vector<10x16xf32>
    %219 = arith.select %215, %218, %182 : vector<10x16xi1>, vector<10x16xf32>
    %220 = vector.broadcast %194 : vector<2x1xi32> to vector<2x16xi32>
    %221 = arith.cmpi eq, %104, %220 : vector<2x16xi32>
    %cst_63 = arith.constant 0xFF800000 : f32
    %222 = vector.broadcast %cst_63 : f32 to vector<2x16xf32>
    %223 = arith.select %221, %222, %186 : vector<2x16xi1>, vector<2x16xf32>
    %cst_64 = arith.constant dense<0xFF800000> : vector<2xf32>
    %224 = vector.multi_reduction <maximumf>, %223, %cst_64 [1] : vector<2x16xf32> to vector<2xf32>
    %225 = vector.shape_cast %224 : vector<2xf32> to vector<2x1xf32>
    %226 = vector.broadcast %225 : vector<2x1xf32> to vector<2x16xf32>
    %227 = arith.cmpf oeq, %223, %226 : vector<2x16xf32>
    %c16_i32_65 = arith.constant 16 : i32
    %228 = vector.broadcast %c16_i32_65 : i32 to vector<2x16xi32>
    %229 = arith.select %227, %104, %228 : vector<2x16xi1>, vector<2x16xi32>
    %cst_66 = arith.constant dense<2147483647> : vector<2xi32>
    %230 = vector.multi_reduction <minsi>, %229, %cst_66 [1] : vector<2x16xi32> to vector<2xi32>
    %231 = vector.shape_cast %230 : vector<2xi32> to vector<2x1xi32>
    %232 = math.tanh %225 : vector<2x1xf32>
    %233 = vector.broadcast %231 : vector<2x1xi32> to vector<2x16xi32>
    %234 = arith.cmpi eq, %104, %233 : vector<2x16xi32>
    %235 = arith.extui %234 : vector<2x16xi1> to vector<2x16xi32>
    %236 = arith.sitofp %235 : vector<2x16xi32> to vector<2x16xf32>
    %237 = vector.broadcast %232 : vector<2x1xf32> to vector<2x16xf32>
    %238 = arith.mulf %236, %237 : vector<2x16xf32>
    %c3_i32 = arith.constant 3 : i32
    %239 = vector.broadcast %c3_i32 : i32 to vector<2x10xi32>
    %240 = arith.cmpi eq, %106, %239 : vector<2x10xi32>
    %241 = arith.addi %231, %109 : vector<2x1xi32>
    %242 = vector.shape_cast %241 : vector<2x1xi32> to vector<2x1xi32>
    %243 = vector.broadcast %242 : vector<2x1xi32> to vector<2x10xi32>
    %244 = arith.select %240, %243, %207 : vector<2x10xi1>, vector<2x10xi32>
    %c3_i32_67 = arith.constant 3 : i32
    %245 = vector.broadcast %c3_i32_67 : i32 to vector<10x16xi32>
    %246 = arith.cmpi eq, %105, %245 : vector<10x16xi32>
    %247 = vector.extract_strided_slice %238 {offsets = [0, 0], sizes = [1, 16], strides = [1, 1]} : vector<2x16xf32> to vector<1x16xf32>
    %248 = vector.shape_cast %247 : vector<1x16xf32> to vector<1x16xf32>
    %249 = vector.broadcast %248 : vector<1x16xf32> to vector<10x16xf32>
    %250 = arith.select %246, %249, %213 : vector<10x16xi1>, vector<10x16xf32>
    %c3_i32_68 = arith.constant 3 : i32
    %251 = vector.broadcast %c3_i32_68 : i32 to vector<10x16xi32>
    %252 = arith.cmpi eq, %105, %251 : vector<10x16xi32>
    %253 = vector.extract_strided_slice %238 {offsets = [1, 0], sizes = [1, 16], strides = [1, 1]} : vector<2x16xf32> to vector<1x16xf32>
    %254 = vector.shape_cast %253 : vector<1x16xf32> to vector<1x16xf32>
    %255 = vector.broadcast %254 : vector<1x16xf32> to vector<10x16xf32>
    %256 = arith.select %252, %255, %219 : vector<10x16xi1>, vector<10x16xf32>
    %257 = vector.broadcast %231 : vector<2x1xi32> to vector<2x16xi32>
    %258 = arith.cmpi eq, %104, %257 : vector<2x16xi32>
    %cst_69 = arith.constant 0xFF800000 : f32
    %259 = vector.broadcast %cst_69 : f32 to vector<2x16xf32>
    %260 = arith.select %258, %259, %223 : vector<2x16xi1>, vector<2x16xf32>
    %cst_70 = arith.constant dense<0xFF800000> : vector<2xf32>
    %261 = vector.multi_reduction <maximumf>, %260, %cst_70 [1] : vector<2x16xf32> to vector<2xf32>
    %262 = vector.shape_cast %261 : vector<2xf32> to vector<2x1xf32>
    %263 = vector.broadcast %262 : vector<2x1xf32> to vector<2x16xf32>
    %264 = arith.cmpf oeq, %260, %263 : vector<2x16xf32>
    %c16_i32_71 = arith.constant 16 : i32
    %265 = vector.broadcast %c16_i32_71 : i32 to vector<2x16xi32>
    %266 = arith.select %264, %104, %265 : vector<2x16xi1>, vector<2x16xi32>
    %cst_72 = arith.constant dense<2147483647> : vector<2xi32>
    %267 = vector.multi_reduction <minsi>, %266, %cst_72 [1] : vector<2x16xi32> to vector<2xi32>
    %268 = vector.shape_cast %267 : vector<2xi32> to vector<2x1xi32>
    %269 = math.tanh %262 : vector<2x1xf32>
    %270 = vector.broadcast %268 : vector<2x1xi32> to vector<2x16xi32>
    %271 = arith.cmpi eq, %104, %270 : vector<2x16xi32>
    %272 = arith.extui %271 : vector<2x16xi1> to vector<2x16xi32>
    %273 = arith.sitofp %272 : vector<2x16xi32> to vector<2x16xf32>
    %274 = vector.broadcast %269 : vector<2x1xf32> to vector<2x16xf32>
    %275 = arith.mulf %273, %274 : vector<2x16xf32>
    %c4_i32 = arith.constant 4 : i32
    %276 = vector.broadcast %c4_i32 : i32 to vector<2x10xi32>
    %277 = arith.cmpi eq, %106, %276 : vector<2x10xi32>
    %278 = arith.addi %268, %109 : vector<2x1xi32>
    %279 = vector.shape_cast %278 : vector<2x1xi32> to vector<2x1xi32>
    %280 = vector.broadcast %279 : vector<2x1xi32> to vector<2x10xi32>
    %281 = arith.select %277, %280, %244 : vector<2x10xi1>, vector<2x10xi32>
    %c4_i32_73 = arith.constant 4 : i32
    %282 = vector.broadcast %c4_i32_73 : i32 to vector<10x16xi32>
    %283 = arith.cmpi eq, %105, %282 : vector<10x16xi32>
    %284 = vector.extract_strided_slice %275 {offsets = [0, 0], sizes = [1, 16], strides = [1, 1]} : vector<2x16xf32> to vector<1x16xf32>
    %285 = vector.shape_cast %284 : vector<1x16xf32> to vector<1x16xf32>
    %286 = vector.broadcast %285 : vector<1x16xf32> to vector<10x16xf32>
    %287 = arith.select %283, %286, %250 : vector<10x16xi1>, vector<10x16xf32>
    %c4_i32_74 = arith.constant 4 : i32
    %288 = vector.broadcast %c4_i32_74 : i32 to vector<10x16xi32>
    %289 = arith.cmpi eq, %105, %288 : vector<10x16xi32>
    %290 = vector.extract_strided_slice %275 {offsets = [1, 0], sizes = [1, 16], strides = [1, 1]} : vector<2x16xf32> to vector<1x16xf32>
    %291 = vector.shape_cast %290 : vector<1x16xf32> to vector<1x16xf32>
    %292 = vector.broadcast %291 : vector<1x16xf32> to vector<10x16xf32>
    %293 = arith.select %289, %292, %256 : vector<10x16xi1>, vector<10x16xf32>
    %294 = vector.broadcast %268 : vector<2x1xi32> to vector<2x16xi32>
    %295 = arith.cmpi eq, %104, %294 : vector<2x16xi32>
    %cst_75 = arith.constant 0xFF800000 : f32
    %296 = vector.broadcast %cst_75 : f32 to vector<2x16xf32>
    %297 = arith.select %295, %296, %260 : vector<2x16xi1>, vector<2x16xf32>
    %cst_76 = arith.constant dense<0xFF800000> : vector<2xf32>
    %298 = vector.multi_reduction <maximumf>, %297, %cst_76 [1] : vector<2x16xf32> to vector<2xf32>
    %299 = vector.shape_cast %298 : vector<2xf32> to vector<2x1xf32>
    %300 = vector.broadcast %299 : vector<2x1xf32> to vector<2x16xf32>
    %301 = arith.cmpf oeq, %297, %300 : vector<2x16xf32>
    %c16_i32_77 = arith.constant 16 : i32
    %302 = vector.broadcast %c16_i32_77 : i32 to vector<2x16xi32>
    %303 = arith.select %301, %104, %302 : vector<2x16xi1>, vector<2x16xi32>
    %cst_78 = arith.constant dense<2147483647> : vector<2xi32>
    %304 = vector.multi_reduction <minsi>, %303, %cst_78 [1] : vector<2x16xi32> to vector<2xi32>
    %305 = vector.shape_cast %304 : vector<2xi32> to vector<2x1xi32>
    %306 = math.tanh %299 : vector<2x1xf32>
    %307 = vector.broadcast %305 : vector<2x1xi32> to vector<2x16xi32>
    %308 = arith.cmpi eq, %104, %307 : vector<2x16xi32>
    %309 = arith.extui %308 : vector<2x16xi1> to vector<2x16xi32>
    %310 = arith.sitofp %309 : vector<2x16xi32> to vector<2x16xf32>
    %311 = vector.broadcast %306 : vector<2x1xf32> to vector<2x16xf32>
    %312 = arith.mulf %310, %311 : vector<2x16xf32>
    %c5_i32 = arith.constant 5 : i32
    %313 = vector.broadcast %c5_i32 : i32 to vector<2x10xi32>
    %314 = arith.cmpi eq, %106, %313 : vector<2x10xi32>
    %315 = arith.addi %305, %109 : vector<2x1xi32>
    %316 = vector.shape_cast %315 : vector<2x1xi32> to vector<2x1xi32>
    %317 = vector.broadcast %316 : vector<2x1xi32> to vector<2x10xi32>
    %318 = arith.select %314, %317, %281 : vector<2x10xi1>, vector<2x10xi32>
    %c5_i32_79 = arith.constant 5 : i32
    %319 = vector.broadcast %c5_i32_79 : i32 to vector<10x16xi32>
    %320 = arith.cmpi eq, %105, %319 : vector<10x16xi32>
    %321 = vector.extract_strided_slice %312 {offsets = [0, 0], sizes = [1, 16], strides = [1, 1]} : vector<2x16xf32> to vector<1x16xf32>
    %322 = vector.shape_cast %321 : vector<1x16xf32> to vector<1x16xf32>
    %323 = vector.broadcast %322 : vector<1x16xf32> to vector<10x16xf32>
    %324 = arith.select %320, %323, %287 : vector<10x16xi1>, vector<10x16xf32>
    %c5_i32_80 = arith.constant 5 : i32
    %325 = vector.broadcast %c5_i32_80 : i32 to vector<10x16xi32>
    %326 = arith.cmpi eq, %105, %325 : vector<10x16xi32>
    %327 = vector.extract_strided_slice %312 {offsets = [1, 0], sizes = [1, 16], strides = [1, 1]} : vector<2x16xf32> to vector<1x16xf32>
    %328 = vector.shape_cast %327 : vector<1x16xf32> to vector<1x16xf32>
    %329 = vector.broadcast %328 : vector<1x16xf32> to vector<10x16xf32>
    %330 = arith.select %326, %329, %293 : vector<10x16xi1>, vector<10x16xf32>
    %331 = vector.broadcast %305 : vector<2x1xi32> to vector<2x16xi32>
    %332 = arith.cmpi eq, %104, %331 : vector<2x16xi32>
    %cst_81 = arith.constant 0xFF800000 : f32
    %333 = vector.broadcast %cst_81 : f32 to vector<2x16xf32>
    %334 = arith.select %332, %333, %297 : vector<2x16xi1>, vector<2x16xf32>
    %cst_82 = arith.constant dense<0xFF800000> : vector<2xf32>
    %335 = vector.multi_reduction <maximumf>, %334, %cst_82 [1] : vector<2x16xf32> to vector<2xf32>
    %336 = vector.shape_cast %335 : vector<2xf32> to vector<2x1xf32>
    %337 = vector.broadcast %336 : vector<2x1xf32> to vector<2x16xf32>
    %338 = arith.cmpf oeq, %334, %337 : vector<2x16xf32>
    %c16_i32_83 = arith.constant 16 : i32
    %339 = vector.broadcast %c16_i32_83 : i32 to vector<2x16xi32>
    %340 = arith.select %338, %104, %339 : vector<2x16xi1>, vector<2x16xi32>
    %cst_84 = arith.constant dense<2147483647> : vector<2xi32>
    %341 = vector.multi_reduction <minsi>, %340, %cst_84 [1] : vector<2x16xi32> to vector<2xi32>
    %342 = vector.shape_cast %341 : vector<2xi32> to vector<2x1xi32>
    %343 = math.tanh %336 : vector<2x1xf32>
    %344 = vector.broadcast %342 : vector<2x1xi32> to vector<2x16xi32>
    %345 = arith.cmpi eq, %104, %344 : vector<2x16xi32>
    %346 = arith.extui %345 : vector<2x16xi1> to vector<2x16xi32>
    %347 = arith.sitofp %346 : vector<2x16xi32> to vector<2x16xf32>
    %348 = vector.broadcast %343 : vector<2x1xf32> to vector<2x16xf32>
    %349 = arith.mulf %347, %348 : vector<2x16xf32>
    %c6_i32 = arith.constant 6 : i32
    %350 = vector.broadcast %c6_i32 : i32 to vector<2x10xi32>
    %351 = arith.cmpi eq, %106, %350 : vector<2x10xi32>
    %352 = arith.addi %342, %109 : vector<2x1xi32>
    %353 = vector.shape_cast %352 : vector<2x1xi32> to vector<2x1xi32>
    %354 = vector.broadcast %353 : vector<2x1xi32> to vector<2x10xi32>
    %355 = arith.select %351, %354, %318 : vector<2x10xi1>, vector<2x10xi32>
    %c6_i32_85 = arith.constant 6 : i32
    %356 = vector.broadcast %c6_i32_85 : i32 to vector<10x16xi32>
    %357 = arith.cmpi eq, %105, %356 : vector<10x16xi32>
    %358 = vector.extract_strided_slice %349 {offsets = [0, 0], sizes = [1, 16], strides = [1, 1]} : vector<2x16xf32> to vector<1x16xf32>
    %359 = vector.shape_cast %358 : vector<1x16xf32> to vector<1x16xf32>
    %360 = vector.broadcast %359 : vector<1x16xf32> to vector<10x16xf32>
    %361 = arith.select %357, %360, %324 : vector<10x16xi1>, vector<10x16xf32>
    %c6_i32_86 = arith.constant 6 : i32
    %362 = vector.broadcast %c6_i32_86 : i32 to vector<10x16xi32>
    %363 = arith.cmpi eq, %105, %362 : vector<10x16xi32>
    %364 = vector.extract_strided_slice %349 {offsets = [1, 0], sizes = [1, 16], strides = [1, 1]} : vector<2x16xf32> to vector<1x16xf32>
    %365 = vector.shape_cast %364 : vector<1x16xf32> to vector<1x16xf32>
    %366 = vector.broadcast %365 : vector<1x16xf32> to vector<10x16xf32>
    %367 = arith.select %363, %366, %330 : vector<10x16xi1>, vector<10x16xf32>
    %368 = vector.broadcast %342 : vector<2x1xi32> to vector<2x16xi32>
    %369 = arith.cmpi eq, %104, %368 : vector<2x16xi32>
    %cst_87 = arith.constant 0xFF800000 : f32
    %370 = vector.broadcast %cst_87 : f32 to vector<2x16xf32>
    %371 = arith.select %369, %370, %334 : vector<2x16xi1>, vector<2x16xf32>
    %cst_88 = arith.constant dense<0xFF800000> : vector<2xf32>
    %372 = vector.multi_reduction <maximumf>, %371, %cst_88 [1] : vector<2x16xf32> to vector<2xf32>
    %373 = vector.shape_cast %372 : vector<2xf32> to vector<2x1xf32>
    %374 = vector.broadcast %373 : vector<2x1xf32> to vector<2x16xf32>
    %375 = arith.cmpf oeq, %371, %374 : vector<2x16xf32>
    %c16_i32_89 = arith.constant 16 : i32
    %376 = vector.broadcast %c16_i32_89 : i32 to vector<2x16xi32>
    %377 = arith.select %375, %104, %376 : vector<2x16xi1>, vector<2x16xi32>
    %cst_90 = arith.constant dense<2147483647> : vector<2xi32>
    %378 = vector.multi_reduction <minsi>, %377, %cst_90 [1] : vector<2x16xi32> to vector<2xi32>
    %379 = vector.shape_cast %378 : vector<2xi32> to vector<2x1xi32>
    %380 = math.tanh %373 : vector<2x1xf32>
    %381 = vector.broadcast %379 : vector<2x1xi32> to vector<2x16xi32>
    %382 = arith.cmpi eq, %104, %381 : vector<2x16xi32>
    %383 = arith.extui %382 : vector<2x16xi1> to vector<2x16xi32>
    %384 = arith.sitofp %383 : vector<2x16xi32> to vector<2x16xf32>
    %385 = vector.broadcast %380 : vector<2x1xf32> to vector<2x16xf32>
    %386 = arith.mulf %384, %385 : vector<2x16xf32>
    %c7_i32 = arith.constant 7 : i32
    %387 = vector.broadcast %c7_i32 : i32 to vector<2x10xi32>
    %388 = arith.cmpi eq, %106, %387 : vector<2x10xi32>
    %389 = arith.addi %379, %109 : vector<2x1xi32>
    %390 = vector.shape_cast %389 : vector<2x1xi32> to vector<2x1xi32>
    %391 = vector.broadcast %390 : vector<2x1xi32> to vector<2x10xi32>
    %392 = arith.select %388, %391, %355 : vector<2x10xi1>, vector<2x10xi32>
    %c7_i32_91 = arith.constant 7 : i32
    %393 = vector.broadcast %c7_i32_91 : i32 to vector<10x16xi32>
    %394 = arith.cmpi eq, %105, %393 : vector<10x16xi32>
    %395 = vector.extract_strided_slice %386 {offsets = [0, 0], sizes = [1, 16], strides = [1, 1]} : vector<2x16xf32> to vector<1x16xf32>
    %396 = vector.shape_cast %395 : vector<1x16xf32> to vector<1x16xf32>
    %397 = vector.broadcast %396 : vector<1x16xf32> to vector<10x16xf32>
    %398 = arith.select %394, %397, %361 : vector<10x16xi1>, vector<10x16xf32>
    %c7_i32_92 = arith.constant 7 : i32
    %399 = vector.broadcast %c7_i32_92 : i32 to vector<10x16xi32>
    %400 = arith.cmpi eq, %105, %399 : vector<10x16xi32>
    %401 = vector.extract_strided_slice %386 {offsets = [1, 0], sizes = [1, 16], strides = [1, 1]} : vector<2x16xf32> to vector<1x16xf32>
    %402 = vector.shape_cast %401 : vector<1x16xf32> to vector<1x16xf32>
    %403 = vector.broadcast %402 : vector<1x16xf32> to vector<10x16xf32>
    %404 = arith.select %400, %403, %367 : vector<10x16xi1>, vector<10x16xf32>
    %405 = vector.broadcast %379 : vector<2x1xi32> to vector<2x16xi32>
    %406 = arith.cmpi eq, %104, %405 : vector<2x16xi32>
    %cst_93 = arith.constant 0xFF800000 : f32
    %407 = vector.broadcast %cst_93 : f32 to vector<2x16xf32>
    %408 = arith.select %406, %407, %371 : vector<2x16xi1>, vector<2x16xf32>
    %cst_94 = arith.constant dense<0xFF800000> : vector<2xf32>
    %409 = vector.multi_reduction <maximumf>, %408, %cst_94 [1] : vector<2x16xf32> to vector<2xf32>
    %410 = vector.shape_cast %409 : vector<2xf32> to vector<2x1xf32>
    %411 = vector.broadcast %410 : vector<2x1xf32> to vector<2x16xf32>
    %412 = arith.cmpf oeq, %408, %411 : vector<2x16xf32>
    %c16_i32_95 = arith.constant 16 : i32
    %413 = vector.broadcast %c16_i32_95 : i32 to vector<2x16xi32>
    %414 = arith.select %412, %104, %413 : vector<2x16xi1>, vector<2x16xi32>
    %cst_96 = arith.constant dense<2147483647> : vector<2xi32>
    %415 = vector.multi_reduction <minsi>, %414, %cst_96 [1] : vector<2x16xi32> to vector<2xi32>
    %416 = vector.shape_cast %415 : vector<2xi32> to vector<2x1xi32>
    %417 = math.tanh %410 : vector<2x1xf32>
    %418 = vector.broadcast %416 : vector<2x1xi32> to vector<2x16xi32>
    %419 = arith.cmpi eq, %104, %418 : vector<2x16xi32>
    %420 = arith.extui %419 : vector<2x16xi1> to vector<2x16xi32>
    %421 = arith.sitofp %420 : vector<2x16xi32> to vector<2x16xf32>
    %422 = vector.broadcast %417 : vector<2x1xf32> to vector<2x16xf32>
    %423 = arith.mulf %421, %422 : vector<2x16xf32>
    %c8_i32 = arith.constant 8 : i32
    %424 = vector.broadcast %c8_i32 : i32 to vector<2x10xi32>
    %425 = arith.cmpi eq, %106, %424 : vector<2x10xi32>
    %426 = arith.addi %416, %109 : vector<2x1xi32>
    %427 = vector.shape_cast %426 : vector<2x1xi32> to vector<2x1xi32>
    %428 = vector.broadcast %427 : vector<2x1xi32> to vector<2x10xi32>
    %429 = arith.select %425, %428, %392 : vector<2x10xi1>, vector<2x10xi32>
    %c8_i32_97 = arith.constant 8 : i32
    %430 = vector.broadcast %c8_i32_97 : i32 to vector<10x16xi32>
    %431 = arith.cmpi eq, %105, %430 : vector<10x16xi32>
    %432 = vector.extract_strided_slice %423 {offsets = [0, 0], sizes = [1, 16], strides = [1, 1]} : vector<2x16xf32> to vector<1x16xf32>
    %433 = vector.shape_cast %432 : vector<1x16xf32> to vector<1x16xf32>
    %434 = vector.broadcast %433 : vector<1x16xf32> to vector<10x16xf32>
    %435 = arith.select %431, %434, %398 : vector<10x16xi1>, vector<10x16xf32>
    %c8_i32_98 = arith.constant 8 : i32
    %436 = vector.broadcast %c8_i32_98 : i32 to vector<10x16xi32>
    %437 = arith.cmpi eq, %105, %436 : vector<10x16xi32>
    %438 = vector.extract_strided_slice %423 {offsets = [1, 0], sizes = [1, 16], strides = [1, 1]} : vector<2x16xf32> to vector<1x16xf32>
    %439 = vector.shape_cast %438 : vector<1x16xf32> to vector<1x16xf32>
    %440 = vector.broadcast %439 : vector<1x16xf32> to vector<10x16xf32>
    %441 = arith.select %437, %440, %404 : vector<10x16xi1>, vector<10x16xf32>
    %442 = vector.broadcast %416 : vector<2x1xi32> to vector<2x16xi32>
    %443 = arith.cmpi eq, %104, %442 : vector<2x16xi32>
    %cst_99 = arith.constant 0xFF800000 : f32
    %444 = vector.broadcast %cst_99 : f32 to vector<2x16xf32>
    %445 = arith.select %443, %444, %408 : vector<2x16xi1>, vector<2x16xf32>
    %cst_100 = arith.constant dense<0xFF800000> : vector<2xf32>
    %446 = vector.multi_reduction <maximumf>, %445, %cst_100 [1] : vector<2x16xf32> to vector<2xf32>
    %447 = vector.shape_cast %446 : vector<2xf32> to vector<2x1xf32>
    %448 = vector.broadcast %447 : vector<2x1xf32> to vector<2x16xf32>
    %449 = arith.cmpf oeq, %445, %448 : vector<2x16xf32>
    %c16_i32_101 = arith.constant 16 : i32
    %450 = vector.broadcast %c16_i32_101 : i32 to vector<2x16xi32>
    %451 = arith.select %449, %104, %450 : vector<2x16xi1>, vector<2x16xi32>
    %cst_102 = arith.constant dense<2147483647> : vector<2xi32>
    %452 = vector.multi_reduction <minsi>, %451, %cst_102 [1] : vector<2x16xi32> to vector<2xi32>
    %453 = vector.shape_cast %452 : vector<2xi32> to vector<2x1xi32>
    %454 = math.tanh %447 : vector<2x1xf32>
    %455 = vector.broadcast %453 : vector<2x1xi32> to vector<2x16xi32>
    %456 = arith.cmpi eq, %104, %455 : vector<2x16xi32>
    %457 = arith.extui %456 : vector<2x16xi1> to vector<2x16xi32>
    %458 = arith.sitofp %457 : vector<2x16xi32> to vector<2x16xf32>
    %459 = vector.broadcast %454 : vector<2x1xf32> to vector<2x16xf32>
    %460 = arith.mulf %458, %459 : vector<2x16xf32>
    %c9_i32 = arith.constant 9 : i32
    %461 = vector.broadcast %c9_i32 : i32 to vector<2x10xi32>
    %462 = arith.cmpi eq, %106, %461 : vector<2x10xi32>
    %463 = arith.addi %453, %109 : vector<2x1xi32>
    %464 = vector.shape_cast %463 : vector<2x1xi32> to vector<2x1xi32>
    %465 = vector.broadcast %464 : vector<2x1xi32> to vector<2x10xi32>
    %466 = arith.select %462, %465, %429 : vector<2x10xi1>, vector<2x10xi32>
    %c9_i32_103 = arith.constant 9 : i32
    %467 = vector.broadcast %c9_i32_103 : i32 to vector<10x16xi32>
    %468 = arith.cmpi eq, %105, %467 : vector<10x16xi32>
    %469 = vector.extract_strided_slice %460 {offsets = [0, 0], sizes = [1, 16], strides = [1, 1]} : vector<2x16xf32> to vector<1x16xf32>
    %470 = vector.shape_cast %469 : vector<1x16xf32> to vector<1x16xf32>
    %471 = vector.broadcast %470 : vector<1x16xf32> to vector<10x16xf32>
    %472 = arith.select %468, %471, %435 : vector<10x16xi1>, vector<10x16xf32>
    %c9_i32_104 = arith.constant 9 : i32
    %473 = vector.broadcast %c9_i32_104 : i32 to vector<10x16xi32>
    %474 = arith.cmpi eq, %105, %473 : vector<10x16xi32>
    %475 = vector.extract_strided_slice %460 {offsets = [1, 0], sizes = [1, 16], strides = [1, 1]} : vector<2x16xf32> to vector<1x16xf32>
    %476 = vector.shape_cast %475 : vector<1x16xf32> to vector<1x16xf32>
    %477 = vector.broadcast %476 : vector<1x16xf32> to vector<10x16xf32>
    %478 = arith.select %474, %477, %441 : vector<10x16xi1>, vector<10x16xf32>
    %c0_105 = arith.constant 0 : index
    %c0_106 = arith.constant 0 : index
    %479 = vector.load %arg12[%c0_105, %c0_106] : memref<10x16xf32, #tpu.memory_space<vmem>>, vector<10x16xf32>
    %480 = tpu.iota {dimensions = array<i32: 0>} : vector<2x1xi32>
    %cst_107 = arith.constant 0.000000e+00 : f32
    %481 = vector.broadcast %cst_107 : f32 to vector<2x1xf32>
    %cst_108 = arith.constant dense<0.000000e+00> : vector<10x16xf32>
    %482 = tpu.matmul %472, %95, %cst_108 {dimension_numbers = #tpu.dot_dimension_numbers<[1], [0], [0], [1], [0, 0, 1, 1], [], []>} : vector<10x16xf32>, vector<16x16xf32>, vector<10x16xf32> -> vector<10x16xf32>
    %483 = arith.mulf %482, %479 : vector<10x16xf32>
    %484 = vector.shape_cast %483 : vector<10x16xf32> to vector<1x10x16xf32>
    %cst_109 = arith.constant dense<0.000000e+00> : vector<1xf32>
    %485 = vector.multi_reduction <add>, %484, %cst_109 [1, 2] : vector<1x10x16xf32> to vector<1xf32>
    %486 = vector.shape_cast %485 : vector<1xf32> to vector<1x1x1xf32>
    %487 = vector.extract %486[0, 0, 0] : f32 from vector<1x1x1xf32>
    %c0_i32_110 = arith.constant 0 : i32
    %488 = vector.broadcast %c0_i32_110 : i32 to vector<2x1xi32>
    %489 = arith.cmpi eq, %480, %488 : vector<2x1xi32>
    %cst_111 = arith.constant 0.000000e+00 : f32
    %490 = vector.broadcast %487 : f32 to vector<2x1xf32>
    %491 = vector.broadcast %cst_111 : f32 to vector<2x1xf32>
    %492 = arith.select %489, %490, %491 : vector<2x1xi1>, vector<2x1xf32>
    %493 = arith.addf %481, %492 : vector<2x1xf32>
    %cst_112 = arith.constant dense<0.000000e+00> : vector<10x16xf32>
    %494 = tpu.matmul %478, %96, %cst_112 {dimension_numbers = #tpu.dot_dimension_numbers<[1], [0], [0], [1], [0, 0, 1, 1], [], []>} : vector<10x16xf32>, vector<16x16xf32>, vector<10x16xf32> -> vector<10x16xf32>
    %495 = arith.mulf %494, %479 : vector<10x16xf32>
    %496 = vector.shape_cast %495 : vector<10x16xf32> to vector<1x10x16xf32>
    %cst_113 = arith.constant dense<0.000000e+00> : vector<1xf32>
    %497 = vector.multi_reduction <add>, %496, %cst_113 [1, 2] : vector<1x10x16xf32> to vector<1xf32>
    %498 = vector.shape_cast %497 : vector<1xf32> to vector<1x1x1xf32>
    %499 = vector.extract %498[0, 0, 0] : f32 from vector<1x1x1xf32>
    %c1_i32_114 = arith.constant 1 : i32
    %500 = vector.broadcast %c1_i32_114 : i32 to vector<2x1xi32>
    %501 = arith.cmpi eq, %480, %500 : vector<2x1xi32>
    %cst_115 = arith.constant 0.000000e+00 : f32
    %502 = vector.broadcast %499 : f32 to vector<2x1xf32>
    %503 = vector.broadcast %cst_115 : f32 to vector<2x1xf32>
    %504 = arith.select %501, %502, %503 : vector<2x1xi1>, vector<2x1xf32>
    %505 = arith.addf %493, %504 : vector<2x1xf32>
    %c0_116 = arith.constant 0 : index
    %c0_117 = arith.constant 0 : index
    %506 = vector.load %arg13[%c0_116, %c0_117] : memref<1x1xf32, #tpu.memory_space<vmem>>, vector<1x1xf32>
    %507 = vector.broadcast %506 : vector<1x1xf32> to vector<2x1xf32>
    %508 = arith.addf %505, %507 : vector<2x1xf32>
    %509 = arith.negf %508 : vector<2x1xf32>
    %510 = math.exp %509 : vector<2x1xf32>
    %cst_118 = arith.constant 1.000000e+00 : f32
    %511 = vector.broadcast %cst_118 : f32 to vector<2x1xf32>
    %512 = arith.addf %511, %510 : vector<2x1xf32>
    %513 = arith.divf %511, %512 : vector<2x1xf32>
    %c0_119 = arith.constant 0 : index
    %c0_120 = arith.constant 0 : index
    %514 = vector.load %arg14[%c0_119, %c0_120] : memref<2x1xf32, #tpu.memory_space<vmem>>, vector<2x1xf32>
    tpu.vector_store %arg14[%c0_119, %c0_120], %513 {strides = array<i32>} : memref<2x1xf32, #tpu.memory_space<vmem>>, vector<2x1xf32>,
    %c0_121 = arith.constant 0 : index
    %c0_122 = arith.constant 0 : index
    %515 = vector.load %arg15[%c0_121, %c0_122] : memref<2x10xi32, #tpu.memory_space<vmem>>, vector<2x10xi32>
    tpu.vector_store %arg15[%c0_121, %c0_122], %466 {strides = array<i32>} : memref<2x10xi32, #tpu.memory_space<vmem>>, vector<2x10xi32>,
    return
  }
}

</mosaic_0001>

<llo_original>
// kernel: temporal_bcgcn_forward.1
$region0: #{temporal_bcgcn_forward.1}
  #allocation0 [shape = 'u32[]', space=smem, size = 0x4, offset = 0x4, fixed_abs, tag = 'smem constant byte address 0x4 - core index']
  #allocation1 [shape = 'u32[72,128]{1,0:T(1,128)}', space=vmem, size = 0x9000, scoped, tag = 'internal scratch']
  #allocation2 [shape = 'f32[1,1]{1,0:T(1,128)S(1)}', space=vmem, size = 0x200, scoped, tag = 'scoped memory for temporal_bcgcn_forward.1']
  %s0 = inlined_call_operand.vmem [shape: s32[2,128], index: 0, kind: input, shape index: {}]
  %s1 = inlined_call_operand.vmem [shape: f32[1,128], index: 1, kind: input, shape index: {}]
  %s2 = inlined_call_operand.vmem [shape: f32[32,16], index: 2, kind: input, shape index: {}]
  %s3 = inlined_call_operand.vmem [shape: f32[16,16], index: 3, kind: input, shape index: {}]
  %s4 = inlined_call_operand.vmem [shape: f32[1,16], index: 4, kind: input, shape index: {}]
  %s5 = inlined_call_operand.vmem [shape: f32[1,16], index: 5, kind: input, shape index: {}]
  %s6 = inlined_call_operand.hbm [shape: f32[1,16], index: 6, kind: input, shape index: {}]
  %s7 = inlined_call_operand.vmem [shape: f32[16,16], index: 7, kind: input, shape index: {}]
  %s8 = inlined_call_operand.hbm [shape: f32[1,16], index: 8, kind: input, shape index: {}]
  %s9 = inlined_call_operand.hbm [shape: f32[1,16], index: 9, kind: input, shape index: {}]
  %s10 = inlined_call_operand.hbm [shape: f32[1,16], index: 10, kind: input, shape index: {}]
  %s11 = inlined_call_operand.hbm [shape: f32[1,16], index: 11, kind: input, shape index: {}]
  %s12 = inlined_call_operand.vmem [shape: f32[10,16], index: 12, kind: input, shape index: {}]
  %s13 = inlined_call_operand.<no memory space> [shape: f32[1,1], index: 13, kind: input, shape index: {}]
  %s14 = inlined_call_operand.vmem [shape: f32[2,1], index: 14, kind: output, shape index: {0}]
  %s15 = inlined_call_operand.vmem [shape: s32[2,10], index: 15, kind: output, shape index: {1}]
  %16 = xla_tuple %s14, %s15
  %s17 = sld [smem:[#allocation0]]
  $region94: #{temporal_bcgcn_forward.1} parent=0
    _
  %s19 = ssub.s32 1, %s17
  %s20 = scalar_select 0, %s19, %s17
  %v21 = vstv %s13
  %22 = vst [vmem:[#allocation2] sm:$0x1] %v21
  $region1: #{temporal_bcgcn_forward.1} parent=0
    #allocation3 [shape = 'u8[512]{0}', space=vmem, size = 0x400, scoped, tag = 'input window, operand 6, single buffered']
    #allocation4 [shape = 's32[1]{0}', space=sflag, size = 0x4, scoped, tag = 'scoped memory for temporal_bcgcn_forward.1']
    #allocation5 [shape = 'u8[512]{0}', space=vmem, size = 0x400, scoped, tag = 'input window, operand 8, single buffered']
    #allocation6 [shape = 's32[1]{0}', space=sflag, size = 0x4, scoped, tag = 'scoped memory for temporal_bcgcn_forward.1']
    #allocation7 [shape = 'u8[512]{0}', space=vmem, size = 0x400, scoped, tag = 'input window, operand 9, single buffered']
    #allocation8 [shape = 'u8[512]{0}', space=vmem, size = 0x400, scoped, tag = 'input window, operand 10, single buffered']
    #allocation9 [shape = 's32[1]{0}', space=sflag, size = 0x4, scoped, tag = 'scoped memory for temporal_bcgcn_forward.1']
    #allocation10 [shape = 'u8[512]{0}', space=vmem, size = 0x400, scoped, tag = 'input window, operand 11, single buffered']
    %23 = vsyncpa [#allocation4], 0
    %24 = vsyncpa [#allocation6], 0
    %25 = vsyncpa [#allocation9], 0
    // Predicated region
    $region2: #{temporal_bcgcn_forward.1} parent=1 // pred_check
      _
    $region3: #{temporal_bcgcn_forward.1} parent=1 // pred_check_branch
      %27 = sbr.rel (0) target = $region5
    $region4: #{temporal_bcgcn_forward.1} parent=1 // pred_region
      _
    $region5: #{temporal_bcgcn_forward.1} parent=1 // pred_fallthru
      _
    // Predicated region
    $region6: #{temporal_bcgcn_forward.1} parent=1 // pred_check
      _
    $region7: #{temporal_bcgcn_forward.1} parent=1 // pred_check_branch
      %29 = sbr.rel (0) target = $region9
    $region8: #{temporal_bcgcn_forward.1} parent=1 // pred_region
      _
    $region9: #{temporal_bcgcn_forward.1} parent=1 // pred_fallthru
      _
    // Predicated region
    $region10: #{temporal_bcgcn_forward.1} parent=1 // pred_check
      _
    $region11: #{temporal_bcgcn_forward.1} parent=1 // pred_check_branch
      %31 = sbr.rel (0) target = $region13
    $region12: #{temporal_bcgcn_forward.1} parent=1 // pred_region
      _
    $region13: #{temporal_bcgcn_forward.1} parent=1 // pred_fallthru
      _
    // Predicated region
    $region14: #{temporal_bcgcn_forward.1} parent=1 // pred_check
      _
    $region15: #{temporal_bcgcn_forward.1} parent=1 // pred_check_branch
      %33 = sbr.rel (0) target = $region17
    $region16: #{temporal_bcgcn_forward.1} parent=1 // pred_region
      _
    $region17: #{temporal_bcgcn_forward.1} parent=1 // pred_fallthru
      _
    // Predicated region
    $region18: #{temporal_bcgcn_forward.1} parent=1 // pred_check
      _
    $region19: #{temporal_bcgcn_forward.1} parent=1 // pred_check_branch
      %35 = sbr.rel (0) target = $region21
    $region20: #{temporal_bcgcn_forward.1} parent=1 // pred_region
      _
    $region21: #{temporal_bcgcn_forward.1} parent=1 // pred_fallthru
      _
    // Predicated region
    $region22: #{temporal_bcgcn_forward.1} parent=1 // pred_check
      _
    $region23: #{temporal_bcgcn_forward.1} parent=1 // pred_check_branch
      %37 = sbr.rel (0) target = $region25
    $region24: #{temporal_bcgcn_forward.1} parent=1 // pred_region
      _
    $region25: #{temporal_bcgcn_forward.1} parent=1 // pred_fallthru
      _
    // Predicated region
    $region26: #{temporal_bcgcn_forward.1} parent=1 // pred_check
      _
    $region27: #{temporal_bcgcn_forward.1} parent=1 // pred_check_branch
      %39 = sbr.rel (0) target = $region29
    $region28: #{temporal_bcgcn_forward.1} parent=1 // pred_region
      %41 = vsyncadd [#allocation4], 0
      %s43 = sshll.u32 %s6, 4
      %s44 = int_to_ptr.hbm [resolvable:$true] %s43
      %s45 = sshll.u32 [#allocation3], 4
      %s46 = int_to_ptr.vmem [resolvable:$true] %s45
      %48 = dma.hbm_to_vmem [thread:$0]  %s44, 16, %s46, [#allocation4]
    $region29: #{temporal_bcgcn_forward.1} parent=1 // pred_fallthru
      _
    // Predicated region
    $region30: #{temporal_bcgcn_forward.1} parent=1 // pred_check
      _
    $region31: #{temporal_bcgcn_forward.1} parent=1 // pred_check_branch
      %50 = sbr.rel (0) target = $region33
    $region32: #{temporal_bcgcn_forward.1} parent=1 // pred_region
      _
    $region33: #{temporal_bcgcn_forward.1} parent=1 // pred_fallthru
      _
    // Predicated region
    $region34: #{temporal_bcgcn_forward.1} parent=1 // pred_check
      _
    $region35: #{temporal_bcgcn_forward.1} parent=1 // pred_check_branch
      %52 = sbr.rel (0) target = $region37
    $region36: #{temporal_bcgcn_forward.1} parent=1 // pred_region
      %54 = vsyncadd [#allocation6], 0
      %s56 = sshll.u32 %s8, 4
      %s57 = int_to_ptr.hbm [resolvable:$true] %s56
      %s58 = sshll.u32 [#allocation5], 4
      %s59 = int_to_ptr.vmem [resolvable:$true] %s58
      %61 = dma.hbm_to_vmem [thread:$0]  %s57, 16, %s59, [#allocation6]
    $region37: #{temporal_bcgcn_forward.1} parent=1 // pred_fallthru
      _
    // Predicated region
    $region38: #{temporal_bcgcn_forward.1} parent=1 // pred_check
      _
    $region39: #{temporal_bcgcn_forward.1} parent=1 // pred_check_branch
      %63 = sbr.rel (0) target = $region41
    $region40: #{temporal_bcgcn_forward.1} parent=1 // pred_region
      %65 = vsyncadd [#allocation6], 0
      %s67 = sshll.u32 %s9, 4
      %s68 = int_to_ptr.hbm [resolvable:$true] %s67
      %s69 = sshll.u32 [#allocation7], 4
      %s70 = int_to_ptr.vmem [resolvable:$true] %s69
      %72 = dma.hbm_to_vmem [thread:$0]  %s68, 16, %s70, [#allocation6]
    $region41: #{temporal_bcgcn_forward.1} parent=1 // pred_fallthru
      _
    // Predicated region
    $region42: #{temporal_bcgcn_forward.1} parent=1 // pred_check
      _
    $region43: #{temporal_bcgcn_forward.1} parent=1 // pred_check_branch
      %74 = sbr.rel (0) target = $region45
    $region44: #{temporal_bcgcn_forward.1} parent=1 // pred_region
      %76 = vsyncadd [#allocation9], 0
      %s78 = sshll.u32 %s10, 4
      %s79 = int_to_ptr.hbm [resolvable:$true] %s78
      %s80 = sshll.u32 [#allocation8], 4
      %s81 = int_to_ptr.vmem [resolvable:$true] %s80
      %83 = dma.hbm_to_vmem [thread:$0]  %s79, 16, %s81, [#allocation9]
    $region45: #{temporal_bcgcn_forward.1} parent=1 // pred_fallthru
      _
    // Predicated region
    $region46: #{temporal_bcgcn_forward.1} parent=1 // pred_check
      _
    $region47: #{temporal_bcgcn_forward.1} parent=1 // pred_check_branch
      %85 = sbr.rel (0) target = $region49
    $region48: #{temporal_bcgcn_forward.1} parent=1 // pred_region
      %87 = vsyncadd [#allocation9], 0
      %s89 = sshll.u32 %s11, 4
      %s90 = int_to_ptr.hbm [resolvable:$true] %s89
      %s91 = sshll.u32 [#allocation10], 4
      %s92 = int_to_ptr.vmem [resolvable:$true] %s91
      %94 = dma.hbm_to_vmem [thread:$0]  %s90, 16, %s92, [#allocation9]
    $region49: #{temporal_bcgcn_forward.1} parent=1 // pred_fallthru
      _
    // Predicated region
    $region50: #{temporal_bcgcn_forward.1} parent=1 // pred_check
      _
    $region51: #{temporal_bcgcn_forward.1} parent=1 // pred_check_branch
      %96 = sbr.rel (0) target = $region53
    $region52: #{temporal_bcgcn_forward.1} parent=1 // pred_region
      _
    $region53: #{temporal_bcgcn_forward.1} parent=1 // pred_fallthru
      _
    // Predicated region
    $region54: #{temporal_bcgcn_forward.1} parent=1 // pred_check
      _
    $region55: #{temporal_bcgcn_forward.1} parent=1 // pred_check_branch
      %98 = sbr.rel (0) target = $region57
    $region56: #{temporal_bcgcn_forward.1} parent=1 // pred_region
      _
    $region57: #{temporal_bcgcn_forward.1} parent=1 // pred_fallthru
      _
    // Predicated region
    $region58: #{temporal_bcgcn_forward.1} parent=1 // pred_check
      _
    $region59: #{temporal_bcgcn_forward.1} parent=1 // pred_check_branch
      %100 = sbr.rel (0) target = $region61
    $region60: #{temporal_bcgcn_forward.1} parent=1 // pred_region
      %102 = dma.done [#allocation4], 16
    $region61: #{temporal_bcgcn_forward.1} parent=1 // pred_fallthru
      _
    // Predicated region
    $region62: #{temporal_bcgcn_forward.1} parent=1 // pred_check
      _
    $region63: #{temporal_bcgcn_forward.1} parent=1 // pred_check_branch
      %104 = sbr.rel (0) target = $region65
    $region64: #{temporal_bcgcn_forward.1} parent=1 // pred_region
      %106 = dma.done [#allocation6], 16
    $region65: #{temporal_bcgcn_forward.1} parent=1 // pred_fallthru
      _
    // Predicated region
    $region66: #{temporal_bcgcn_forward.1} parent=1 // pred_check
      _
    $region67: #{temporal_bcgcn_forward.1} parent=1 // pred_check_branch
      %108 = sbr.rel (0) target = $region69
    $region68: #{temporal_bcgcn_forward.1} parent=1 // pred_region
      %110 = dma.done [#allocation6], 16
    $region69: #{temporal_bcgcn_forward.1} parent=1 // pred_fallthru
      _
    // Predicated region
    $region70: #{temporal_bcgcn_forward.1} parent=1 // pred_check
      _
    $region71: #{temporal_bcgcn_forward.1} parent=1 // pred_check_branch
      %112 = sbr.rel (0) target = $region73
    $region72: #{temporal_bcgcn_forward.1} parent=1 // pred_region
      %114 = dma.done [#allocation9], 16
    $region73: #{temporal_bcgcn_forward.1} parent=1 // pred_fallthru
      _
    // Predicated region
    $region74: #{temporal_bcgcn_forward.1} parent=1 // pred_check
      _
    $region75: #{temporal_bcgcn_forward.1} parent=1 // pred_check_branch
      %116 = sbr.rel (0) target = $region77
    $region76: #{temporal_bcgcn_forward.1} parent=1 // pred_region
      %118 = dma.done [#allocation9], 16
    $region77: #{temporal_bcgcn_forward.1} parent=1 // pred_fallthru
      _
    %v119 = vld [vmem:[%s0] sm:$0x1]
    %v120 = vld [vmem:[%s0 + $0x1] sm:$0x1]
    %v121 = vlaneseq
    %v122 = vshrl.u32 %v121, 7
    %v123 = vadd.s32 %v122, 8
    %v124 = vadd.s32 %v122, 16
    %v125 = vadd.s32 %v122, 24
    %v126 = vperm.slane %v119, 0
    %vm127 = vcmp.eq.s32.totalorder %v122, %v126
    %vm128 = vcmp.eq.s32.totalorder %v123, %v126
    %vm129 = vcmp.eq.s32.totalorder %v124, %v126
    %vm130 = vcmp.eq.s32.totalorder %v125, %v126
    %v131 = vsel %vm127, 1, 0
    %v132 = vsel %vm128, 1, 0
    %v133 = vsel %vm129, 1, 0
    %v134 = vsel %vm130, 1, 0
    %v135 = vcvt.s32.f32 %v131
    %v136 = vcvt.s32.f32 %v132
    %v137 = vcvt.s32.f32 %v133
    %v138 = vcvt.s32.f32 %v134
    %v139 = vperm.slane %v120, 0
    %vm140 = vcmp.eq.s32.totalorder %v122, %v139
    %vm141 = vcmp.eq.s32.totalorder %v123, %v139
    %vm142 = vcmp.eq.s32.totalorder %v124, %v139
    %vm143 = vcmp.eq.s32.totalorder %v125, %v139
    %v144 = vsel %vm140, 1, 0
    %v145 = vsel %vm141, 1, 0
    %v146 = vsel %vm142, 1, 0
    %v147 = vsel %vm143, 1, 0
    %v148 = vcvt.s32.f32 %v144
    %v149 = vcvt.s32.f32 %v145
    %v150 = vcvt.s32.f32 %v146
    %v151 = vcvt.s32.f32 %v147
    %v152 = vld [vmem:[%s1] sm:$0x1]
    %v154 = vperm.slane %v152, 0
    %v156 = vmul.f32 %v148, %v154
    %v157 = vmul.f32 %v149, %v154
    %v158 = vmul.f32 %v150, %v154
    %v159 = vmul.f32 %v151, %v154
    %v160 = vlaneseq
    %v161 = vand.u32 %v160, 127
    %vm162 = vcmp.eq.s32.totalorder %v122, %v161
    %vm163 = vcmp.eq.s32.totalorder %v123, %v161
    %vm164 = vcmp.eq.s32.totalorder %v124, %v161
    %vm165 = vcmp.eq.s32.totalorder %v125, %v161
    %v166 = vsel %vm162, 1, 0
    %v167 = vsel %vm163, 1, 0
    %v168 = vsel %vm164, 1, 0
    %v169 = vsel %vm165, 1, 0
    %v170 = vcvt.s32.f32 %v166
    %v171 = vcvt.s32.f32 %v167
    %v172 = vcvt.s32.f32 %v168
    %v173 = vcvt.s32.f32 %v169
    %174 = vmatpush.xpose.msra.mxu0 0.0
    %175 = vmatpush.xpose.msra.mxu0 0.0
    %176 = vmatpush.xpose.msra.mxu0 0.0
    %177 = vmatpush.xpose.msra.mxu0 0.0
    %178 = vmatpush.xpose.msra.mxu0 0.0
    %179 = vmatpush.xpose.msra.mxu0 0.0
    %180 = vmatpush.xpose.msra.mxu0 0.0
    %181 = vmatpush.xpose.msra.mxu0 0.0
    %182 = vmatpush.xpose.msra.mxu0 0.0
    %183 = vmatpush.xpose.msra.mxu0 0.0
    %184 = vmatpush.xpose.msra.mxu0 0.0
    %185 = vmatpush.xpose.msra.mxu0 0.0
    %186 = vmatpush.xpose.msra.mxu0 %v138
    %187 = vmatpush.xpose.msra.mxu0 %v137
    %188 = vmatpush.xpose.msra.mxu0 %v136
    %189 = vmatpush.xpose.msra.mxu0 %v135
    %190 = vmatmul.f32.gmra.mxu0 %v156
    %v191 = vpop.f32.mrf.mxu0
    %v192 = vadd.f32 %v170, %v191
    %193 = vmatmul.f32.gmra.mxu0 %v157
    %v194 = vpop.f32.mrf.mxu0
    %v195 = vadd.f32 %v171, %v194
    %196 = vmatmul.f32.gmra.mxu0 %v158
    %v197 = vpop.f32.mrf.mxu0
    %v198 = vadd.f32 %v172, %v197
    %199 = vmatmul.f32.gmra.mxu0 %v159
    %v200 = vpop.f32.mrf.mxu0
    %v201 = vadd.f32 %v173, %v200
    %202 = vdwg.mxu0
    %vm203 = vcmask 261120
    %v204 = vsel %vm203, %v192, 0.0
    %205 = vadd.xlane.f32.xlu0 %v204
    %v206 = vpop.xlane.xlu0 %205
    %v207 = vsel %vm203, %v195, 0.0
    %208 = vadd.xlane.f32.xlu0 %v207
    %v209 = vpop.xlane.xlu0 %208
    %v210 = vsel %vm203, %v198, 0.0
    %211 = vadd.xlane.f32.xlu0 %v210
    %v212 = vpop.xlane.xlu0 %211
    %v213 = vsel %vm203, %v201, 0.0
    %214 = vadd.xlane.f32.xlu0 %v213
    %v215 = vpop.xlane.xlu0 %214
    %v216 = vrcp.pop %v206
    %v217 = vrcp.pop %v209
    %v218 = vrcp.pop %v212
    %v219 = vrcp.pop %v215
    %v220 = vmul.f32 %v192, %v216
    %v221 = vmul.f32 %v195, %v217
    %v222 = vmul.f32 %v198, %v218
    %v223 = vmul.f32 %v201, %v219
    %v224 = vld [vmem:[%s2] sm:$0xff]
    %v225 = vld [vmem:[%s2 + $0x8] sm:$0xff]
    %v226 = vld [vmem:[%s2 + $0x10] sm:$0xff]
    %v227 = vld [vmem:[%s2 + $0x18] sm:$0xff]
    %v229 = vsel %vm203, %v220, 0
    %v232 = vsel %vm203, %v221, 0
    %v235 = vsel %vm203, %v222, 0
    %v238 = vsel %vm203, %v223, 0
    %240 = vmatpush.msra.mxu0 0.0
    %241 = vmatpush.msra.mxu0 0.0
    %242 = vmatpush.msra.mxu0 0.0
    %243 = vmatpush.msra.mxu0 0.0
    %244 = vmatpush.msra.mxu0 0.0
    %245 = vmatpush.msra.mxu0 0.0
    %246 = vmatpush.msra.mxu0 0.0
    %247 = vmatpush.msra.mxu0 0.0
    %248 = vmatpush.msra.mxu0 0.0
    %249 = vmatpush.msra.mxu0 0.0
    %250 = vmatpush.msra.mxu0 0.0
    %251 = vmatpush.msra.mxu0 0.0
    %252 = vmatpush.msra.mxu0 %v227
    %253 = vmatpush.msra.mxu0 %v226
    %254 = vmatpush.msra.mxu0 %v225
    %255 = vmatpush.msra.mxu0 %v224
    %256 = vmatmul.f32.gmra.mxu0 %v229
    %v257 = vpop.f32.mrf.mxu0
    %v258 = vadd.f32 0.0, %v257
    %259 = vmatmul.f32.gmra.mxu0 %v232
    %v260 = vpop.f32.mrf.mxu0
    %v261 = vadd.f32 0.0, %v260
    %262 = vmatmul.f32.gmra.mxu0 %v235
    %v263 = vpop.f32.mrf.mxu0
    %v264 = vadd.f32 0.0, %v263
    %265 = vmatmul.f32.gmra.mxu0 %v238
    %v266 = vpop.f32.mrf.mxu0
    %v267 = vadd.f32 0.0, %v266
    %268 = vdwg.mxu0
    %v269 = vld [vmem:[%s3] sm:$0xff]
    %v270 = vld [vmem:[%s3 + $0x8] sm:$0xff]
    %v271 = vld [vmem:[%s4] sm:$0x1]
    %v273 = vperm.slane %v271, 0
    %vm275 = vcmask 130048
    %v277 = vsel %vm275, %v258, 0
    %v280 = vsel %vm275, %v261, 0
    %v283 = vsel %vm275, %v264, 0
    %v286 = vsel %vm275, %v267, 0
    %288 = vmatpush.msra.mxu0 0.0
    %289 = vmatpush.msra.mxu0 0.0
    %290 = vmatpush.msra.mxu0 0.0
    %291 = vmatpush.msra.mxu0 0.0
    %292 = vmatpush.msra.mxu0 0.0
    %293 = vmatpush.msra.mxu0 0.0
    %294 = vmatpush.msra.mxu0 0.0
    %295 = vmatpush.msra.mxu0 0.0
    %296 = vmatpush.msra.mxu0 0.0
    %297 = vmatpush.msra.mxu0 0.0
    %298 = vmatpush.msra.mxu0 0.0
    %299 = vmatpush.msra.mxu0 0.0
    %300 = vmatpush.msra.mxu0 0.0
    %301 = vmatpush.msra.mxu0 0.0
    %302 = vmatpush.msra.mxu0 %v270
    %303 = vmatpush.msra.mxu0 %v269
    %304 = vmatmul.f32.gmra.mxu0 %v277
    %v305 = vpop.f32.mrf.mxu0
    %v306 = vadd.f32 %v273, %v305
    %307 = vmatmul.f32.gmra.mxu0 %v280
    %v308 = vpop.f32.mrf.mxu0
    %v309 = vadd.f32 %v273, %v308
    %310 = vmatmul.f32.gmra.mxu0 %v283
    %v311 = vpop.f32.mrf.mxu0
    %v312 = vadd.f32 %v273, %v311
    %313 = vmatmul.f32.gmra.mxu0 %v286
    %v314 = vpop.f32.mrf.mxu0
    %v315 = vadd.f32 %v273, %v314
    %316 = vdwg.mxu0
    %v317 = vld [vmem:[%s5] sm:$0x1]
    %v318 = vld [vmem:[#allocation3] sm:$0x1]
    %v319 = vsel %vm275, %v306, 0.0
    %v320 = vsel %vm275, %v309, 0.0
    %v321 = vadd.f32 %v319, %v320
    %v322 = vsel %vm275, %v312, 0.0
    %v323 = vadd.f32 %v321, %v322
    %v324 = vsel %vm275, %v315, 0.0
    %v325 = vadd.f32 %v323, %v324
    %v326 = vrot.slane %v325, 4
    %v327 = vadd.f32 %v325, %v326
    %v328 = vrot.slane %v327, 2
    %v329 = vadd.f32 %v327, %v328
    %v330 = vrot.slane %v329, 1
    %v331 = vadd.f32 %v329, %v330
    %v332 = vrcp.pop 32.0
    %v333 = vmul.f32 32.0, %v332
    %v334 = vsub.f32 1.0, %v333
    %v335 = vmul.f32 %v332, %v334
    %v336 = vadd.f32 %v332, %v335
    %vm337 = vweird.f32 %v332
    %v338 = vsel %vm337, %v332, %v336
    %v339 = vmul.f32 %v331, %v338
    %v340 = vsub.f32 %v306, %v339
    %v341 = vsub.f32 %v309, %v339
    %v342 = vsub.f32 %v312, %v339
    %v343 = vsub.f32 %v315, %v339
    %v344 = vmul.f32 %v340, %v340
    %v345 = vmul.f32 %v341, %v341
    %v346 = vmul.f32 %v342, %v342
    %v347 = vmul.f32 %v343, %v343
    %v348 = vsel %vm275, %v344, 0.0
    %v349 = vsel %vm275, %v345, 0.0
    %v350 = vadd.f32 %v348, %v349
    %v351 = vsel %vm275, %v346, 0.0
    %v352 = vadd.f32 %v350, %v351
    %v353 = vsel %vm275, %v347, 0.0
    %v354 = vadd.f32 %v352, %v353
    %v355 = vrot.slane %v354, 4
    %v356 = vadd.f32 %v354, %v355
    %v357 = vrot.slane %v356, 2
    %v358 = vadd.f32 %v356, %v357
    %v359 = vrot.slane %v358, 1
    %v360 = vadd.f32 %v358, %v359
    %v361 = vmul.f32 %v360, %v338
    %v362 = vadd.f32 %v361, 1e-05
    %v363 = vrsqrt.pop %v362
    %v364 = vmul.f32 %v363, %v362
    %v365 = vmul.f32 %v364, %v363
    %v366 = vmul.f32 0.5, %v365
    %v367 = vsub.f32 1.5, %v366
    %v368 = vmul.f32 %v363, %v367
    %vm369 = vweird.f32 %v362
    %vm370 = vweird.f32 %v363
    %vm371 = vmor %vm369, %vm370
    %v372 = vsel %vm371, %v363, %v368
    %v373 = vmul.f32 %v340, %v372
    %v374 = vmul.f32 %v341, %v372
    %v375 = vmul.f32 %v342, %v372
    %v376 = vmul.f32 %v343, %v372
    %v378 = vperm.slane %v317, 0
    %v380 = vmul.f32 %v373, %v378
    %v381 = vmul.f32 %v374, %v378
    %v382 = vmul.f32 %v375, %v378
    %v383 = vmul.f32 %v376, %v378
    %v385 = vperm.slane %v318, 0
    %v387 = vadd.f32 %v380, %v385
    %v388 = vadd.f32 %v381, %v385
    %v389 = vadd.f32 %v382, %v385
    %v390 = vadd.f32 %v383, %v385
    %391 = vmatpush.msra.mxu0 0.0
    %392 = vmatpush.msra.mxu0 0.0
    %393 = vmatpush.msra.mxu0 0.0
    %394 = vmatpush.msra.mxu0 0.0
    %395 = vmatpush.msra.mxu0 0.0
    %396 = vmatpush.msra.mxu0 0.0
    %397 = vmatpush.msra.mxu0 0.0
    %398 = vmatpush.msra.mxu0 0.0
    %399 = vmatpush.msra.mxu0 0.0
    %400 = vmatpush.msra.mxu0 0.0
    %401 = vmatpush.msra.mxu0 0.0
    %402 = vmatpush.msra.mxu0 0.0
    %403 = vmatpush.msra.mxu0 %v390
    %404 = vmatpush.msra.mxu0 %v389
    %405 = vmatpush.msra.mxu0 %v388
    %406 = vmatpush.msra.mxu0 %v387
    %407 = vmatmul.f32.gmra.mxu0 %v229
    %v408 = vpop.f32.mrf.mxu0
    %v409 = vadd.f32 0.0, %v408
    %410 = vmatmul.f32.gmra.mxu0 %v232
    %v411 = vpop.f32.mrf.mxu0
    %v412 = vadd.f32 0.0, %v411
    %413 = vmatmul.f32.gmra.mxu0 %v235
    %v414 = vpop.f32.mrf.mxu0
    %v415 = vadd.f32 0.0, %v414
    %416 = vmatmul.f32.gmra.mxu0 %v238
    %v417 = vpop.f32.mrf.mxu0
    %v418 = vadd.f32 0.0, %v417
    %419 = vdwg.mxu0
    %v420 = vld [vmem:[%s7] sm:$0xff]
    %v421 = vld [vmem:[%s7 + $0x8] sm:$0xff]
    %v422 = vld [vmem:[#allocation5] sm:$0x1]
    %v424 = vperm.slane %v422, 0
    %v427 = vsel %vm275, %v409, 0
    %v430 = vsel %vm275, %v412, 0
    %v433 = vsel %vm275, %v415, 0
    %v436 = vsel %vm275, %v418, 0
    %438 = vmatpush.msra.mxu0 0.0
    %439 = vmatpush.msra.mxu0 0.0
    %440 = vmatpush.msra.mxu0 0.0
    %441 = vmatpush.msra.mxu0 0.0
    %442 = vmatpush.msra.mxu0 0.0
    %443 = vmatpush.msra.mxu0 0.0
    %444 = vmatpush.msra.mxu0 0.0
    %445 = vmatpush.msra.mxu0 0.0
    %446 = vmatpush.msra.mxu0 0.0
    %447 = vmatpush.msra.mxu0 0.0
    %448 = vmatpush.msra.mxu0 0.0
    %449 = vmatpush.msra.mxu0 0.0
    %450 = vmatpush.msra.mxu0 0.0
    %451 = vmatpush.msra.mxu0 0.0
    %452 = vmatpush.msra.mxu0 %v421
    %453 = vmatpush.msra.mxu0 %v420
    %454 = vmatmul.f32.gmra.mxu0 %v427
    %v455 = vpop.f32.mrf.mxu0
    %v456 = vadd.f32 %v424, %v455
    %457 = vmatmul.f32.gmra.mxu0 %v430
    %v458 = vpop.f32.mrf.mxu0
    %v459 = vadd.f32 %v424, %v458
    %460 = vmatmul.f32.gmra.mxu0 %v433
    %v461 = vpop.f32.mrf.mxu0
    %v462 = vadd.f32 %v424, %v461
    %463 = vmatmul.f32.gmra.mxu0 %v436
    %v464 = vpop.f32.mrf.mxu0
    %v465 = vadd.f32 %v424, %v464
    %466 = vdwg.mxu0
    %v467 = vld [vmem:[#allocation7] sm:$0x1]
    %v468 = vld [vmem:[#allocation8] sm:$0x1]
    %v469 = vsel %vm275, %v456, 0.0
    %v470 = vsel %vm275, %v459, 0.0
    %v471 = vadd.f32 %v469, %v470
    %v472 = vsel %vm275, %v462, 0.0
    %v473 = vadd.f32 %v471, %v472
    %v474 = vsel %vm275, %v465, 0.0
    %v475 = vadd.f32 %v473, %v474
    %v476 = vrot.slane %v475, 4
    %v477 = vadd.f32 %v475, %v476
    %v478 = vrot.slane %v477, 2
    %v479 = vadd.f32 %v477, %v478
    %v480 = vrot.slane %v479, 1
    %v481 = vadd.f32 %v479, %v480
    %v482 = vmul.f32 %v481, %v338
    %v483 = vsub.f32 %v456, %v482
    %v484 = vsub.f32 %v459, %v482
    %v485 = vsub.f32 %v462, %v482
    %v486 = vsub.f32 %v465, %v482
    %v487 = vmul.f32 %v483, %v483
    %v488 = vmul.f32 %v484, %v484
    %v489 = vmul.f32 %v485, %v485
    %v490 = vmul.f32 %v486, %v486
    %v491 = vsel %vm275, %v487, 0.0
    %v492 = vsel %vm275, %v488, 0.0
    %v493 = vadd.f32 %v491, %v492
    %v494 = vsel %vm275, %v489, 0.0
    %v495 = vadd.f32 %v493, %v494
    %v496 = vsel %vm275, %v490, 0.0
    %v497 = vadd.f32 %v495, %v496
    %v498 = vrot.slane %v497, 4
    %v499 = vadd.f32 %v497, %v498
    %v500 = vrot.slane %v499, 2
    %v501 = vadd.f32 %v499, %v500
    %v502 = vrot.slane %v501, 1
    %v503 = vadd.f32 %v501, %v502
    %v504 = vmul.f32 %v503, %v338
    %v505 = vadd.f32 %v504, 1e-05
    %v506 = vrsqrt.pop %v505
    %v507 = vmul.f32 %v506, %v505
    %v508 = vmul.f32 %v507, %v506
    %v509 = vmul.f32 0.5, %v508
    %v510 = vsub.f32 1.5, %v509
    %v511 = vmul.f32 %v506, %v510
    %vm512 = vweird.f32 %v505
    %vm513 = vweird.f32 %v506
    %vm514 = vmor %vm512, %vm513
    %v515 = vsel %vm514, %v506, %v511
    %v516 = vmul.f32 %v483, %v515
    %v517 = vmul.f32 %v484, %v515
    %v518 = vmul.f32 %v485, %v515
    %v519 = vmul.f32 %v486, %v515
    %v521 = vperm.slane %v467, 0
    %v523 = vmul.f32 %v516, %v521
    %v524 = vmul.f32 %v517, %v521
    %v525 = vmul.f32 %v518, %v521
    %v526 = vmul.f32 %v519, %v521
    %v528 = vperm.slane %v468, 0
    %v530 = vadd.f32 %v523, %v528
    %v531 = vadd.f32 %v524, %v528
    %v532 = vadd.f32 %v525, %v528
    %v533 = vadd.f32 %v526, %v528
    %v534 = vld [vmem:[#allocation10] sm:$0x1]
    %v535 = vmul.f32 %v534, %v534
    %vm536 = vcmask 122880
    %v537 = vsel %vm536, %v535, 0.0
    %538 = vadd.xlane.f32.xlu0 %v537
    %v539 = vpop.xlane.xlu0 %538
    %v540 = vrot.slane %v539, 4
    %v541 = vadd.f32 %v539, %v540
    %v542 = vrot.slane %v541, 2
    %v543 = vadd.f32 %v541, %v542
    %v544 = vrot.slane %v543, 1
    %v545 = vadd.f32 %v543, %v544
    %s546 = vtos %v545
    %s547 = sadd.f32 %s546, 1e-12
    %v548 = vstv %s547
    %v549 = vrsqrt.pop %v548
    %v550 = vmul.f32 %v549, %v548
    %v551 = vmul.f32 %v550, %v549
    %v552 = vmul.f32 0.5, %v551
    %v553 = vsub.f32 1.5, %v552
    %v554 = vmul.f32 %v549, %v553
    %vm555 = vweird.f32 %v548
    %vm556 = vweird.f32 %v549
    %vm557 = vmor %vm555, %vm556
    %v558 = vsel %vm557, %v549, %v554
    %s559 = vtos %v558
    %v561 = vsel %vm275, %v534, 0
    %v564 = vsel %vm275, %v530, 0
    %v567 = vsel %vm275, %v531, 0
    %569 = vmatpush.xpose.msra.mxu0 0.0
    %570 = vmatpush.xpose.msra.mxu0 0.0
    %571 = vmatpush.xpose.msra.mxu0 0.0
    %572 = vmatpush.xpose.msra.mxu0 0.0
    %573 = vmatpush.xpose.msra.mxu0 0.0
    %574 = vmatpush.xpose.msra.mxu0 0.0
    %575 = vmatpush.xpose.msra.mxu0 0.0
    %576 = vmatpush.xpose.msra.mxu0 0.0
    %577 = vmatpush.xpose.msra.mxu0 0.0
    %578 = vmatpush.xpose.msra.mxu0 0.0
    %579 = vmatpush.xpose.msra.mxu0 0.0
    %580 = vmatpush.xpose.msra.mxu0 0.0
    %581 = vmatpush.xpose.msra.mxu0 0.0
    %582 = vmatpush.xpose.msra.mxu0 0.0
    %583 = vmatpush.xpose.msra.mxu0 %v567
    %584 = vmatpush.xpose.msra.mxu0 %v564
    %585 = vmatmul.f32.gmra.mxu0 %v561
    %v586 = vpop.f32.mrf.mxu0
    %v587 = vadd.f32 0.0, %v586
    %588 = vdwg.mxu0
    %v589 = vstv %s559
    %v590 = vmul.f32 %v587, %v589
    %v592 = vsel %vm275, %v532, 0
    %v595 = vsel %vm275, %v533, 0
    %597 = vmatpush.xpose.msra.mxu0 0.0
    %598 = vmatpush.xpose.msra.mxu0 0.0
    %599 = vmatpush.xpose.msra.mxu0 0.0
    %600 = vmatpush.xpose.msra.mxu0 0.0
    %601 = vmatpush.xpose.msra.mxu0 0.0
    %602 = vmatpush.xpose.msra.mxu0 0.0
    %603 = vmatpush.xpose.msra.mxu0 0.0
    %604 = vmatpush.xpose.msra.mxu0 0.0
    %605 = vmatpush.xpose.msra.mxu0 0.0
    %606 = vmatpush.xpose.msra.mxu0 0.0
    %607 = vmatpush.xpose.msra.mxu0 0.0
    %608 = vmatpush.xpose.msra.mxu0 0.0
    %609 = vmatpush.xpose.msra.mxu0 0.0
    %610 = vmatpush.xpose.msra.mxu0 0.0
    %611 = vmatpush.xpose.msra.mxu0 %v595
    %612 = vmatpush.xpose.msra.mxu0 %v592
    %613 = vmatmul.f32.gmra.mxu0 %v561
    %v614 = vpop.f32.mrf.mxu0
    %v615 = vadd.f32 0.0, %v614
    %616 = vdwg.mxu0
    %v617 = vmul.f32 %v615, %v589
    %v619 = vrot.slane %v617, 7
    %vm621 = vcmask 1040384
    %v622 = vsel %vm621, %v590, %v619
    %v623 = vmul.u32 %v122, 16
    %vm624 = vcmask 123904
    %v625 = vsel %vm624, %v622, -inf
    %626 = vmax.xlane.f32.xlu0 %v625
    %v627 = vpop.xlane.xlu0 %626
    %vm628 = vcmp.eq.f32.partialorder %v622, %v627
    %v629 = vsel %vm628, %v161, 16
    %v630 = vsel %vm624, %v629, 2147483647
    %v631 = vand.u32 %v630, 65535
    %v632 = vshra.s32 %v630, 16
    %v633 = vcvt.s32.f32 %v631
    %v634 = vcvt.s32.f32 %v632
    %635 = vmin.xlane.f32.xlu0 %v634
    %v636 = vpop.xlane.xlu0 %635
    %vm637 = vcmp.eq.f32.partialorder %v634, %v636
    %v638 = vsel %vm637, %v633, inf
    %639 = vmin.xlane.f32.xlu0 %v638
    %v640 = vpop.xlane.xlu0 %639
    %v641 = vcvt.f32.s32 %v640
    %v642 = vcvt.f32.s32 %v636
    %v643 = vshll.u32 %v642, 16
    %v644 = vadd.s32 %v643, %v641
    %v645 = vtanh.pop %v627
    %vm646 = vcmp.eq.s32.totalorder %v161, %v644
    %v647 = vsel %vm646, 1, 0
    %v648 = vcvt.s32.f32 %v647
    %v649 = vmul.f32 %v648, %v645
    %vm650 = vcmp.eq.s32.totalorder %v161, 0
    %v651 = vadd.s32 %v644, %v623
    %v652 = vsel %vm650, %v651, 0
    %vm653 = vcmp.eq.s32.totalorder %v122, 0
    %vm654 = vcmp.eq.s32.totalorder %v123, 0
    %v655 = vperm.slane %v649, 0
    %v656 = vsel %vm653, %v655, 0.0
    %v657 = vsel %vm654, %v655, 0.0
    %v658 = vperm.slane %v649, 1
    %v659 = vsel %vm653, %v658, 0.0
    %v660 = vsel %vm654, %v658, 0.0
    %v661 = vsel %vm646, -inf, %v622
    %v662 = vsel %vm624, %v661, -inf
    %663 = vmax.xlane.f32.xlu0 %v662
    %v664 = vpop.xlane.xlu0 %663
    %vm665 = vcmp.eq.f32.partialorder %v661, %v664
    %v666 = vsel %vm665, %v161, 16
    %v667 = vsel %vm624, %v666, 2147483647
    %v668 = vand.u32 %v667, 65535
    %v669 = vshra.s32 %v667, 16
    %v670 = vcvt.s32.f32 %v668
    %v671 = vcvt.s32.f32 %v669
    %672 = vmin.xlane.f32.xlu0 %v671
    %v673 = vpop.xlane.xlu0 %672
    %vm674 = vcmp.eq.f32.partialorder %v671, %v673
    %v675 = vsel %vm674, %v670, inf
    %676 = vmin.xlane.f32.xlu0 %v675
    %v677 = vpop.xlane.xlu0 %676
    %v678 = vcvt.f32.s32 %v677
    %v679 = vcvt.f32.s32 %v673
    %v680 = vshll.u32 %v679, 16
    %v681 = vadd.s32 %v680, %v678
    %v682 = vtanh.pop %v664
    %vm683 = vcmp.eq.s32.totalorder %v161, %v681
    %v684 = vsel %vm683, 1, 0
    %v685 = vcvt.s32.f32 %v684
    %v686 = vmul.f32 %v685, %v682
    %vm687 = vcmp.eq.s32.totalorder %v161, 1
    %v688 = vadd.s32 %v681, %v623
    %v689 = vsel %vm687, %v688, %v652
    %vm690 = vcmp.eq.s32.totalorder %v122, 1
    %vm691 = vcmp.eq.s32.totalorder %v123, 1
    %v692 = vperm.slane %v686, 0
    %v693 = vsel %vm690, %v692, %v656
    %v694 = vsel %vm691, %v692, %v657
    %v695 = vperm.slane %v686, 1
    %v696 = vsel %vm690, %v695, %v659
    %v697 = vsel %vm691, %v695, %v660
    %v698 = vsel %vm683, -inf, %v661
    %v699 = vsel %vm624, %v698, -inf
    %700 = vmax.xlane.f32.xlu0 %v699
    %v701 = vpop.xlane.xlu0 %700
    %vm702 = vcmp.eq.f32.partialorder %v698, %v701
    %v703 = vsel %vm702, %v161, 16
    %v704 = vsel %vm624, %v703, 2147483647
    %v705 = vand.u32 %v704, 65535
    %v706 = vshra.s32 %v704, 16
    %v707 = vcvt.s32.f32 %v705
    %v708 = vcvt.s32.f32 %v706
    %709 = vmin.xlane.f32.xlu0 %v708
    %v710 = vpop.xlane.xlu0 %709
    %vm711 = vcmp.eq.f32.partialorder %v708, %v710
    %v712 = vsel %vm711, %v707, inf
    %713 = vmin.xlane.f32.xlu0 %v712
    %v714 = vpop.xlane.xlu0 %713
    %v715 = vcvt.f32.s32 %v714
    %v716 = vcvt.f32.s32 %v710
    %v717 = vshll.u32 %v716, 16
    %v718 = vadd.s32 %v717, %v715
    %v719 = vtanh.pop %v701
    %vm720 = vcmp.eq.s32.totalorder %v161, %v718
    %v721 = vsel %vm720, 1, 0
    %v722 = vcvt.s32.f32 %v721
    %v723 = vmul.f32 %v722, %v719
    %vm724 = vcmp.eq.s32.totalorder %v161, 2
    %v725 = vadd.s32 %v718, %v623
    %v726 = vsel %vm724, %v725, %v689
    %vm727 = vcmp.eq.s32.totalorder %v122, 2
    %vm728 = vcmp.eq.s32.totalorder %v123, 2
    %v729 = vperm.slane %v723, 0
    %v730 = vsel %vm727, %v729, %v693
    %v731 = vsel %vm728, %v729, %v694
    %v732 = vperm.slane %v723, 1
    %v733 = vsel %vm727, %v732, %v696
    %v734 = vsel %vm728, %v732, %v697
    %v735 = vsel %vm720, -inf, %v698
    %v736 = vsel %vm624, %v735, -inf
    %737 = vmax.xlane.f32.xlu0 %v736
    %v738 = vpop.xlane.xlu0 %737
    %vm739 = vcmp.eq.f32.partialorder %v735, %v738
    %v740 = vsel %vm739, %v161, 16
    %v741 = vsel %vm624, %v740, 2147483647
    %v742 = vand.u32 %v741, 65535
    %v743 = vshra.s32 %v741, 16
    %v744 = vcvt.s32.f32 %v742
    %v745 = vcvt.s32.f32 %v743
    %746 = vmin.xlane.f32.xlu0 %v745
    %v747 = vpop.xlane.xlu0 %746
    %vm748 = vcmp.eq.f32.partialorder %v745, %v747
    %v749 = vsel %vm748, %v744, inf
    %750 = vmin.xlane.f32.xlu0 %v749
    %v751 = vpop.xlane.xlu0 %750
    %v752 = vcvt.f32.s32 %v751
    %v753 = vcvt.f32.s32 %v747
    %v754 = vshll.u32 %v753, 16
    %v755 = vadd.s32 %v754, %v752
    %v756 = vtanh.pop %v738
    %vm757 = vcmp.eq.s32.totalorder %v161, %v755
    %v758 = vsel %vm757, 1, 0
    %v759 = vcvt.s32.f32 %v758
    %v760 = vmul.f32 %v759, %v756
    %vm761 = vcmp.eq.s32.totalorder %v161, 3
    %v762 = vadd.s32 %v755, %v623
    %v763 = vsel %vm761, %v762, %v726
    %vm764 = vcmp.eq.s32.totalorder %v122, 3
    %vm765 = vcmp.eq.s32.totalorder %v123, 3
    %v766 = vperm.slane %v760, 0
    %v767 = vsel %vm764, %v766, %v730
    %v768 = vsel %vm765, %v766, %v731
    %v769 = vperm.slane %v760, 1
    %v770 = vsel %vm764, %v769, %v733
    %v771 = vsel %vm765, %v769, %v734
    %v772 = vsel %vm757, -inf, %v735
    %v773 = vsel %vm624, %v772, -inf
    %774 = vmax.xlane.f32.xlu0 %v773
    %v775 = vpop.xlane.xlu0 %774
    %vm776 = vcmp.eq.f32.partialorder %v772, %v775
    %v777 = vsel %vm776, %v161, 16
    %v778 = vsel %vm624, %v777, 2147483647
    %v779 = vand.u32 %v778, 65535
    %v780 = vshra.s32 %v778, 16
    %v781 = vcvt.s32.f32 %v779
    %v782 = vcvt.s32.f32 %v780
    %783 = vmin.xlane.f32.xlu0 %v782
    %v784 = vpop.xlane.xlu0 %783
    %vm785 = vcmp.eq.f32.partialorder %v782, %v784
    %v786 = vsel %vm785, %v781, inf
    %787 = vmin.xlane.f32.xlu0 %v786
    %v788 = vpop.xlane.xlu0 %787
    %v789 = vcvt.f32.s32 %v788
    %v790 = vcvt.f32.s32 %v784
    %v791 = vshll.u32 %v790, 16
    %v792 = vadd.s32 %v791, %v789
    %v793 = vtanh.pop %v775
    %vm794 = vcmp.eq.s32.totalorder %v161, %v792
    %v795 = vsel %vm794, 1, 0
    %v796 = vcvt.s32.f32 %v795
    %v797 = vmul.f32 %v796, %v793
    %vm798 = vcmp.eq.s32.totalorder %v161, 4
    %v799 = vadd.s32 %v792, %v623
    %v800 = vsel %vm798, %v799, %v763
    %vm801 = vcmp.eq.s32.totalorder %v122, 4
    %vm802 = vcmp.eq.s32.totalorder %v123, 4
    %v803 = vperm.slane %v797, 0
    %v804 = vsel %vm801, %v803, %v767
    %v805 = vsel %vm802, %v803, %v768
    %v806 = vperm.slane %v797, 1
    %v807 = vsel %vm801, %v806, %v770
    %v808 = vsel %vm802, %v806, %v771
    %v809 = vsel %vm794, -inf, %v772
    %v810 = vsel %vm624, %v809, -inf
    %811 = vmax.xlane.f32.xlu0 %v810
    %v812 = vpop.xlane.xlu0 %811
    %vm813 = vcmp.eq.f32.partialorder %v809, %v812
    %v814 = vsel %vm813, %v161, 16
    %v815 = vsel %vm624, %v814, 2147483647
    %v816 = vand.u32 %v815, 65535
    %v817 = vshra.s32 %v815, 16
    %v818 = vcvt.s32.f32 %v816
    %v819 = vcvt.s32.f32 %v817
    %820 = vmin.xlane.f32.xlu0 %v819
    %v821 = vpop.xlane.xlu0 %820
    %vm822 = vcmp.eq.f32.partialorder %v819, %v821
    %v823 = vsel %vm822, %v818, inf
    %824 = vmin.xlane.f32.xlu0 %v823
    %v825 = vpop.xlane.xlu0 %824
    %v826 = vcvt.f32.s32 %v825
    %v827 = vcvt.f32.s32 %v821
    %v828 = vshll.u32 %v827, 16
    %v829 = vadd.s32 %v828, %v826
    %v830 = vtanh.pop %v812
    %vm831 = vcmp.eq.s32.totalorder %v161, %v829
    %v832 = vsel %vm831, 1, 0
    %v833 = vcvt.s32.f32 %v832
    %v834 = vmul.f32 %v833, %v830
    %vm835 = vcmp.eq.s32.totalorder %v161, 5
    %v836 = vadd.s32 %v829, %v623
    %v837 = vsel %vm835, %v836, %v800
    %vm838 = vcmp.eq.s32.totalorder %v122, 5
    %vm839 = vcmp.eq.s32.totalorder %v123, 5
    %v840 = vperm.slane %v834, 0
    %v841 = vsel %vm838, %v840, %v804
    %v842 = vsel %vm839, %v840, %v805
    %v843 = vperm.slane %v834, 1
    %v844 = vsel %vm838, %v843, %v807
    %v845 = vsel %vm839, %v843, %v808
    %v846 = vsel %vm831, -inf, %v809
    %v847 = vsel %vm624, %v846, -inf
    %848 = vmax.xlane.f32.xlu0 %v847
    %v849 = vpop.xlane.xlu0 %848
    %vm850 = vcmp.eq.f32.partialorder %v846, %v849
    %v851 = vsel %vm850, %v161, 16
    %v852 = vsel %vm624, %v851, 2147483647
    %v853 = vand.u32 %v852, 65535
    %v854 = vshra.s32 %v852, 16
    %v855 = vcvt.s32.f32 %v853
    %v856 = vcvt.s32.f32 %v854
    %857 = vmin.xlane.f32.xlu0 %v856
    %v858 = vpop.xlane.xlu0 %857
    %vm859 = vcmp.eq.f32.partialorder %v856, %v858
    %v860 = vsel %vm859, %v855, inf
    %861 = vmin.xlane.f32.xlu0 %v860
    %v862 = vpop.xlane.xlu0 %861
    %v863 = vcvt.f32.s32 %v862
    %v864 = vcvt.f32.s32 %v858
    %v865 = vshll.u32 %v864, 16
    %v866 = vadd.s32 %v865, %v863
    %v867 = vtanh.pop %v849
    %vm868 = vcmp.eq.s32.totalorder %v161, %v866
    %v869 = vsel %vm868, 1, 0
    %v870 = vcvt.s32.f32 %v869
    %v871 = vmul.f32 %v870, %v867
    %vm872 = vcmp.eq.s32.totalorder %v161, 6
    %v873 = vadd.s32 %v866, %v623
    %v874 = vsel %vm872, %v873, %v837
    %vm875 = vcmp.eq.s32.totalorder %v122, 6
    %vm876 = vcmp.eq.s32.totalorder %v123, 6
    %v877 = vperm.slane %v871, 0
    %v878 = vsel %vm875, %v877, %v841
    %v879 = vsel %vm876, %v877, %v842
    %v880 = vperm.slane %v871, 1
    %v881 = vsel %vm875, %v880, %v844
    %v882 = vsel %vm876, %v880, %v845
    %v883 = vsel %vm868, -inf, %v846
    %v884 = vsel %vm624, %v883, -inf
    %885 = vmax.xlane.f32.xlu0 %v884
    %v886 = vpop.xlane.xlu0 %885
    %vm887 = vcmp.eq.f32.partialorder %v883, %v886
    %v888 = vsel %vm887, %v161, 16
    %v889 = vsel %vm624, %v888, 2147483647
    %v890 = vand.u32 %v889, 65535
    %v891 = vshra.s32 %v889, 16
    %v892 = vcvt.s32.f32 %v890
    %v893 = vcvt.s32.f32 %v891
    %894 = vmin.xlane.f32.xlu0 %v893
    %v895 = vpop.xlane.xlu0 %894
    %vm896 = vcmp.eq.f32.partialorder %v893, %v895
    %v897 = vsel %vm896, %v892, inf
    %898 = vmin.xlane.f32.xlu0 %v897
    %v899 = vpop.xlane.xlu0 %898
    %v900 = vcvt.f32.s32 %v899
    %v901 = vcvt.f32.s32 %v895
    %v902 = vshll.u32 %v901, 16
    %v903 = vadd.s32 %v902, %v900
    %v904 = vtanh.pop %v886
    %vm905 = vcmp.eq.s32.totalorder %v161, %v903
    %v906 = vsel %vm905, 1, 0
    %v907 = vcvt.s32.f32 %v906
    %v908 = vmul.f32 %v907, %v904
    %vm909 = vcmp.eq.s32.totalorder %v161, 7
    %v910 = vadd.s32 %v903, %v623
    %v911 = vsel %vm909, %v910, %v874
    %vm912 = vcmp.eq.s32.totalorder %v122, 7
    %vm913 = vcmp.eq.s32.totalorder %v123, 7
    %v914 = vperm.slane %v908, 0
    %v915 = vsel %vm912, %v914, %v878
    %v916 = vsel %vm913, %v914, %v879
    %v917 = vperm.slane %v908, 1
    %v918 = vsel %vm912, %v917, %v881
    %v919 = vsel %vm913, %v917, %v882
    %v920 = vsel %vm905, -inf, %v883
    %v921 = vsel %vm624, %v920, -inf
    %922 = vmax.xlane.f32.xlu0 %v921
    %v923 = vpop.xlane.xlu0 %922
    %vm924 = vcmp.eq.f32.partialorder %v920, %v923
    %v925 = vsel %vm924, %v161, 16
    %v926 = vsel %vm624, %v925, 2147483647
    %v927 = vand.u32 %v926, 65535
    %v928 = vshra.s32 %v926, 16
    %v929 = vcvt.s32.f32 %v927
    %v930 = vcvt.s32.f32 %v928
    %931 = vmin.xlane.f32.xlu0 %v930
    %v932 = vpop.xlane.xlu0 %931
    %vm933 = vcmp.eq.f32.partialorder %v930, %v932
    %v934 = vsel %vm933, %v929, inf
    %935 = vmin.xlane.f32.xlu0 %v934
    %v936 = vpop.xlane.xlu0 %935
    %v937 = vcvt.f32.s32 %v936
    %v938 = vcvt.f32.s32 %v932
    %v939 = vshll.u32 %v938, 16
    %v940 = vadd.s32 %v939, %v937
    %v941 = vtanh.pop %v923
    %vm942 = vcmp.eq.s32.totalorder %v161, %v940
    %v943 = vsel %vm942, 1, 0
    %v944 = vcvt.s32.f32 %v943
    %v945 = vmul.f32 %v944, %v941
    %vm946 = vcmp.eq.s32.totalorder %v161, 8
    %v947 = vadd.s32 %v940, %v623
    %v948 = vsel %vm946, %v947, %v911
    %vm949 = vcmp.eq.s32.totalorder %v122, 8
    %vm950 = vcmp.eq.s32.totalorder %v123, 8
    %v951 = vperm.slane %v945, 0
    %v952 = vsel %vm949, %v951, %v915
    %v953 = vsel %vm950, %v951, %v916
    %v954 = vperm.slane %v945, 1
    %v955 = vsel %vm949, %v954, %v918
    %v956 = vsel %vm950, %v954, %v919
    %v957 = vsel %vm942, -inf, %v920
    %v958 = vsel %vm624, %v957, -inf
    %959 = vmax.xlane.f32.xlu0 %v958
    %v960 = vpop.xlane.xlu0 %959
    %vm961 = vcmp.eq.f32.partialorder %v957, %v960
    %v962 = vsel %vm961, %v161, 16
    %v963 = vsel %vm624, %v962, 2147483647
    %v964 = vand.u32 %v963, 65535
    %v965 = vshra.s32 %v963, 16
    %v966 = vcvt.s32.f32 %v964
    %v967 = vcvt.s32.f32 %v965
    %968 = vmin.xlane.f32.xlu0 %v967
    %v969 = vpop.xlane.xlu0 %968
    %vm970 = vcmp.eq.f32.partialorder %v967, %v969
    %v971 = vsel %vm970, %v966, inf
    %972 = vmin.xlane.f32.xlu0 %v971
    %v973 = vpop.xlane.xlu0 %972
    %v974 = vcvt.f32.s32 %v973
    %v975 = vcvt.f32.s32 %v969
    %v976 = vshll.u32 %v975, 16
    %v977 = vadd.s32 %v976, %v974
    %v978 = vtanh.pop %v960
    %vm979 = vcmp.eq.s32.totalorder %v161, %v977
    %v980 = vsel %vm979, 1, 0
    %v981 = vcvt.s32.f32 %v980
    %v982 = vmul.f32 %v981, %v978
    %vm983 = vcmp.eq.s32.totalorder %v161, 9
    %v984 = vadd.s32 %v977, %v623
    %v985 = vsel %vm983, %v984, %v948
    %vm986 = vcmp.eq.s32.totalorder %v122, 9
    %vm987 = vcmp.eq.s32.totalorder %v123, 9
    %v988 = vperm.slane %v982, 0
    %v989 = vsel %vm986, %v988, %v952
    %v990 = vsel %vm987, %v988, %v953
    %v991 = vperm.slane %v982, 1
    %v992 = vsel %vm986, %v991, %v955
    %v993 = vsel %vm987, %v991, %v956
    %v994 = vld [vmem:[%s12] sm:$0xff]
    %v995 = vld [vmem:[%s12 + $0x8] sm:$0x3]
    %v997 = vsel %vm275, %v989, 0
    %v1000 = vsel %vm275, %v990, 0
    %1002 = vmatpush.msra.mxu0 0.0
    %1003 = vmatpush.msra.mxu0 0.0
    %1004 = vmatpush.msra.mxu0 0.0
    %1005 = vmatpush.msra.mxu0 0.0
    %1006 = vmatpush.msra.mxu0 0.0
    %1007 = vmatpush.msra.mxu0 0.0
    %1008 = vmatpush.msra.mxu0 0.0
    %1009 = vmatpush.msra.mxu0 0.0
    %1010 = vmatpush.msra.mxu0 0.0
    %1011 = vmatpush.msra.mxu0 0.0
    %1012 = vmatpush.msra.mxu0 0.0
    %1013 = vmatpush.msra.mxu0 0.0
    %1014 = vmatpush.msra.mxu0 0.0
    %1015 = vmatpush.msra.mxu0 0.0
    %1016 = vmatpush.msra.mxu0 %v531
    %1017 = vmatpush.msra.mxu0 %v530
    %1018 = vmatmul.f32.gmra.mxu0 %v997
    %v1019 = vpop.f32.mrf.mxu0
    %v1020 = vadd.f32 0.0, %v1019
    %1021 = vmatmul.f32.gmra.mxu0 %v1000
    %v1022 = vpop.f32.mrf.mxu0
    %v1023 = vadd.f32 0.0, %v1022
    %1024 = vdwg.mxu0
    %v1025 = vmul.f32 %v1020, %v994
    %v1026 = vmul.f32 %v1023, %v995
    %v1027 = vsel %vm275, %v1025, 0.0
    %v1028 = vsel %vm624, %v1026, 0.0
    %v1029 = vadd.f32 %v1027, %v1028
    %1030 = vadd.xlane.f32.xlu0 %v1029
    %v1031 = vpop.xlane.xlu0 %1030
    %v1032 = vrot.slane %v1031, 4
    %v1033 = vadd.f32 %v1031, %v1032
    %v1034 = vrot.slane %v1033, 2
    %v1035 = vadd.f32 %v1033, %v1034
    %v1036 = vrot.slane %v1035, 1
    %v1037 = vadd.f32 %v1035, %v1036
    %s1038 = vtos %v1037
    %v1039 = vstv %s1038
    %v1040 = vsel %vm653, %v1039, 0.0
    %v1041 = vadd.f32 %v1040, 0.0
    %v1043 = vsel %vm275, %v992, 0
    %v1046 = vsel %vm275, %v993, 0
    %1048 = vmatpush.msra.mxu0 0.0
    %1049 = vmatpush.msra.mxu0 0.0
    %1050 = vmatpush.msra.mxu0 0.0
    %1051 = vmatpush.msra.mxu0 0.0
    %1052 = vmatpush.msra.mxu0 0.0
    %1053 = vmatpush.msra.mxu0 0.0
    %1054 = vmatpush.msra.mxu0 0.0
    %1055 = vmatpush.msra.mxu0 0.0
    %1056 = vmatpush.msra.mxu0 0.0
    %1057 = vmatpush.msra.mxu0 0.0
    %1058 = vmatpush.msra.mxu0 0.0
    %1059 = vmatpush.msra.mxu0 0.0
    %1060 = vmatpush.msra.mxu0 0.0
    %1061 = vmatpush.msra.mxu0 0.0
    %1062 = vmatpush.msra.mxu0 %v533
    %1063 = vmatpush.msra.mxu0 %v532
    %1064 = vmatmul.f32.gmra.mxu0 %v1043
    %v1065 = vpop.f32.mrf.mxu0
    %v1066 = vadd.f32 0.0, %v1065
    %1067 = vmatmul.f32.gmra.mxu0 %v1046
    %v1068 = vpop.f32.mrf.mxu0
    %v1069 = vadd.f32 0.0, %v1068
    %1070 = vdwg.mxu0
    %v1071 = vmul.f32 %v1066, %v994
    %v1072 = vmul.f32 %v1069, %v995
    %v1073 = vsel %vm275, %v1071, 0.0
    %v1074 = vsel %vm624, %v1072, 0.0
    %v1075 = vadd.f32 %v1073, %v1074
    %1076 = vadd.xlane.f32.xlu0 %v1075
    %v1077 = vpop.xlane.xlu0 %1076
    %v1078 = vrot.slane %v1077, 4
    %v1079 = vadd.f32 %v1077, %v1078
    %v1080 = vrot.slane %v1079, 2
    %v1081 = vadd.f32 %v1079, %v1080
    %v1082 = vrot.slane %v1081, 1
    %v1083 = vadd.f32 %v1081, %v1082
    %s1084 = vtos %v1083
    %v1085 = vstv %s1084
    %v1086 = vsel %vm690, %v1085, 0.0
    %v1087 = vadd.f32 %v1041, %v1086
    %v1088 = vld [vmem:[#allocation2] sm:$0x1]
    %v1090 = vperm.slane %v1088, 0
    %v1092 = vadd.f32 %v1087, %v1090
    %v1093 = vxor.u32 %v1092, 2147483648
    %v1094 = vmul.f32 %v1093, 1.442695
    %v1095 = vpow.pop %v1094
    %v1096 = vadd.f32 %v1095, 1.0
    %v1097 = vrcp.pop %v1096
    %v1098 = vmul.f32 %v1096, %v1097
    %v1099 = vsub.f32 1.0, %v1098
    %v1100 = vmul.f32 %v1097, %v1099
    %v1101 = vadd.f32 %v1097, %v1100
    %vm1102 = vweird.f32 %v1096
    %vm1103 = vweird.f32 %v1097
    %vm1104 = vmor %vm1102, %vm1103
    %v1105 = vsel %vm1104, %v1097, %v1101
    %v1106 = vand.u32 2147483647, %v1096
    %vm1107 = vcmp.eq.f32.partialorder %v1106, 8.507059e+37
    %v1108 = vand.u32 %v1096, 2147483648
    %v1109 = vor.u32 1.1754944e-38, %v1108
    %v1110 = vsel %vm1107, %v1109, %v1105
    %v1111 = vmul.f32 1.0, %v1110
    %vm1112 = vcmask 1024
    %1113 = vst.msk [vmem:[%s14] sm:$0x3] %vm1112, %v1111
    %vm1114 = vcmask 74752
    %1115 = vst.msk [vmem:[%s15] sm:$0x3] %vm1114, %v985
    // Predicated region
    $region78: #{temporal_bcgcn_forward.1} parent=1 // pred_check
      _
    $region79: #{temporal_bcgcn_forward.1} parent=1 // pred_check_branch
      %1117 = sbr.rel (0) target = $region81
    $region80: #{temporal_bcgcn_forward.1} parent=1 // pred_region
      _
    $region81: #{temporal_bcgcn_forward.1} parent=1 // pred_fallthru
      _
    // Predicated region
    $region82: #{temporal_bcgcn_forward.1} parent=1 // pred_check
      _
    $region83: #{temporal_bcgcn_forward.1} parent=1 // pred_check_branch
      %1119 = sbr.rel (0) target = $region85
    $region84: #{temporal_bcgcn_forward.1} parent=1 // pred_region
      _
    $region85: #{temporal_bcgcn_forward.1} parent=1 // pred_fallthru
      _
    // Predicated region
    $region86: #{temporal_bcgcn_forward.1} parent=1 // pred_check
      _
    $region87: #{temporal_bcgcn_forward.1} parent=1 // pred_check_branch
      %1121 = sbr.rel (0) target = $region89
    $region88: #{temporal_bcgcn_forward.1} parent=1 // pred_region
      _
    $region89: #{temporal_bcgcn_forward.1} parent=1 // pred_fallthru
      _
    // Predicated region
    $region90: #{temporal_bcgcn_forward.1} parent=1 // pred_check
      _
    $region91: #{temporal_bcgcn_forward.1} parent=1 // pred_check_branch
      %1123 = sbr.rel (0) target = $region93
    $region92: #{temporal_bcgcn_forward.1} parent=1 // pred_region
      _
    $region93: #{temporal_bcgcn_forward.1} parent=1 // pred_fallthru
      _
    %1124 = vsyncpa [#allocation4], 1
    %1125 = vsyncpa [#allocation6], 1
    %1126 = vsyncpa [#allocation9], 1

</llo_original>
